<compile_context>
chip_gen: v5e
topology: v5e:2x2
jax: 0.10.0
libtpu: 0.0.40
codegen_flags: <defaults>
</compile_context>

<pallas_src>
import functools

import jax
import jax.numpy as jnp
from jax.experimental import pallas as pl
from jax.experimental.pallas import tpu as pltpu

LANE = 128


# ---------------------------------------------------------------- helpers ---
def _layernorm(x, w, b, eps=1e-5):
    mean = jnp.mean(x, axis=-1, keepdims=True)
    var = jnp.mean((x - mean) ** 2, axis=-1, keepdims=True)
    return (x - mean) * jax.lax.rsqrt(var + eps) * w + b


# ------------------------------------------------------------- fused kernel -
def csi_kernel(x_ref, len_ref, src_ref, y_ref,
               wa_ref, ba_ref, ln1w_ref, ln1b_ref,
               wih_ref, whh_ref, bg_ref, ln2w_ref, ln2b_ref, wr_ref, br_ref,
               wu_ref, bu_ref, lnuw_ref, lnub_ref, ws_ref, bs_ref,
               wv_ref, wp_ref, bint_ref,
               vpad_ref, spad_ref, outpad_ref,
               gx_ref,
               *, alpha, Bp, T, H):
    f32 = jnp.float32

    # ---------------- CaptureModule ----------------
    # Hoisted, non-recurrent work: embedding + LN + tanh + LSTM input
    # projection for all (T*Bp) rows at once (x is time-major: row = t*Bp + b).
    # TODO(synk): at large T*B chunk this over a grid axis / emit_pipeline and
    # set vmem_limit_bytes explicitly so it scales under v7x's 64 MiB VMEM.
    x = x_ref[...]                                                    # (T*Bp, Dx)
    e = jnp.tanh(_layernorm(
        jnp.dot(x, wa_ref[...], preferred_element_type=f32) + ba_ref[...],
        ln1w_ref[...], ln1b_ref[...]))
    # dropout_wa: identity (inference mode)
    gx_ref[...] = (jnp.dot(e, wih_ref[...], preferred_element_type=f32)
                   + bg_ref[...])                                     # (T*Bp, 128)

    lengths = len_ref[...]                                            # (Bp, 1) int32
    lane = jax.lax.broadcasted_iota(jnp.int32, (Bp, LANE), 1)
    is_g = jnp.logical_and(lane >= 2 * H, lane < 3 * H)               # tanh gate lanes

    h0 = jnp.zeros((Bp, LANE), f32)
    c0 = jnp.zeros((Bp, LANE), f32)

    # Recurrence: only h @ Whh stays on the serial path.  Gates are packed
    # [i|f|g|o] into ONE 128-lane slab; sub-slabs are re-aligned with XLU rolls.
    # TODO(synk): hold Whh resident in the MXU across steps with
    # pltpu.matmul_push_rhs / matmul_acc_lhs / matmul_pop.
    def step(t, carry):
        h, c = carry
        row0 = pl.multiple_of(t * Bp, 8)                              # aligned slab
        gx = gx_ref[pl.ds(row0, Bp), :]                               # (Bp, 128)
        gates = jnp.dot(h, whh_ref[...], preferred_element_type=f32) + gx
        act = jnp.where(is_g, jnp.tanh(gates), jax.nn.sigmoid(gates)) # 1 sig + 1 tanh pass
        i_a = act                                                      # lanes [0,H)
        f_a = pltpu.roll(act, LANE - H, 1)                             # f -> lane 0
        g_a = pltpu.roll(act, LANE - 2 * H, 1)                         # g -> lane 0
        o_a = pltpu.roll(act, LANE - 3 * H, 1)                         # o -> lane 0
        c_new = f_a * c + i_a * g_a
        h_new = o_a * jnp.tanh(c_new)
        valid = t < lengths                                            # (Bp, 1)
        h = jnp.where(valid, h_new, h)                                 # packed-seq emu
        c = jnp.where(valid, c_new, c)
        return h, c

    h, c = jax.lax.fori_loop(0, T, step, (h0, c0), unroll=True)

    h_T = _layernorm(h[:, :H], ln2w_ref[...], ln2b_ref[...])          # (Bp, H)
    # dropout_wr: identity (inference mode)
    v_pad = jnp.tanh(jnp.dot(h_T, wr_ref[...], preferred_element_type=f32)
                     + br_ref[...])                                   # (Bp, 128)
    vpad_ref[...] = v_pad

    # ---------------- ScoreModule ----------------
    # TODO(synk): on v7x run this independent branch on the second TensorCore
    # (pl.core_map over create_tensorcore_mesh) while core 0 runs the LSTM.
    y = y_ref[...]                                                    # (N, Dy)
    y_t = jnp.tanh(_layernorm(
        jnp.dot(y, wu_ref[...], preferred_element_type=f32) + bu_ref[...],
        lnuw_ref[...], lnub_ref[...]))
    s_pad = jax.nn.sigmoid(jnp.dot(y_t, ws_ref[...], preferred_element_type=f32)
                           + bs_ref[...])                             # (N, 128), col 0 = s
    spad_ref[...] = s_pad

    # ------------- scatter-mean + IntegrateModule -------------
    # TODO(synk): tile the one-hot matmul over N (arbitrary grid axis + pl.when
    # accumulator) when N is large.
    N = y.shape[0]
    src = src_ref[...]                                                # (1, N) int32
    rows = jax.lax.broadcasted_iota(jnp.int32, (Bp, N), 0)
    one_hot = (rows == src).astype(f32)                               # (Bp, N)
    # rhs: col 0 = s, col 1 = 1, rest 0 -> one matmul gives sums AND counts.
    col = jax.lax.broadcasted_iota(jnp.int32, (N, LANE), 1)
    rhs = jnp.where(col == 0, s_pad, jnp.where(col == 1, 1.0, 0.0))   # (N, 128)
    sc = jnp.dot(one_hot, rhs, preferred_element_type=f32)            # (Bp, 128)
    sums = sc[:, 0:1]
    counts = sc[:, 1:2]
    p_j = alpha * (sums / jnp.maximum(counts, 1.0))                   # (Bp, 1)

    # cat((v_j, p_j), dim=1) @ W^T == v_j @ Wv + p_j * wp
    wp = wp_ref[0, 0]
    bint = bint_ref[0, 0]
    logits = (jnp.dot(v_pad, wv_ref[...], preferred_element_type=f32)
              + p_j * wp + bint)                                      # (Bp, 1)
    outpad_ref[...] = jnp.broadcast_to(jax.nn.sigmoid(logits),
                                       (Bp, outpad_ref.shape[1]))


# ------------------------------------------------------- one-time weight prep
def prepare_params(params):
    """Pad / repack weights once (outside the per-call path)."""
    E = params["wih"].shape[0]
    H = params["whh"].shape[0]
    Dv = params["wr"].shape[1]
    Eu = params["wu"].shape[1]
    G = 4 * H
    assert G <= LANE, "packed-gate kernel assumes 4*dim_hidden <= 128"

    # TODO(synk): store the large read-only operands (wa, wih, whh, wu, x) as
    # bf16 at scale to halve DMA bytes (keep f32 accumulation in the dots).
    wih_p = jnp.zeros((E, LANE), jnp.float32).at[:, :G].set(params["wih"])
    whh_p = jnp.zeros((LANE, LANE), jnp.float32).at[:H, :G].set(params["whh"])
    bg_p = jnp.zeros((1, LANE), jnp.float32).at[:, :G].set(
        params["bih"] + params["bhh"])
    wr_p = jnp.zeros((H, LANE), jnp.float32).at[:, :Dv].set(params["wr"])
    br_p = jnp.zeros((1, LANE), jnp.float32).at[:, :Dv].set(params["br"])
    ws_p = jnp.zeros((Eu, LANE), jnp.float32).at[:, :1].set(params["ws"])
    bs_p = jnp.zeros((1, LANE), jnp.float32).at[:, :1].set(params["bs"])
    wv_p = jnp.zeros((LANE, 1), jnp.float32).at[:Dv, :].set(params["wint"][:Dv, :])
    wp = params["wint"][Dv:, :]                                       # (1, 1)
    prep = dict(params)
    prep.update(wih_p=wih_p, whh_p=whh_p, bg_p=bg_p, wr_p=wr_p, br_p=br_p,
                ws_p=ws_p, bs_p=bs_p, wv_p=wv_p, wp=wp, H=H, Dv=Dv)
    return prep


# ------------------------------------------------------------------ wrapper -
def csi_forward(prep, x_t, lengths, y_flat, src_idx, alpha=1.0):
    B, T, Dx = x_t.shape
    N, _ = y_flat.shape
    H, Dv = prep["H"], prep["Dv"]
    Bp = max(8, ((B + 7) // 8) * 8)        # sublane-aligned batch

    # time-major, batch padded to Bp: timestep t occupies rows [t*Bp, (t+1)*Bp)
    x_tm = jnp.transpose(x_t, (1, 0, 2))                              # (T, B, Dx)
    x_tm = jnp.pad(x_tm, ((0, 0), (0, Bp - B), (0, 0))).reshape(T * Bp, Dx)
    lengths2d = jnp.pad(lengths.astype(jnp.int32), (0, Bp - B)).reshape(Bp, 1)
    src2d = src_idx.reshape(1, N).astype(jnp.int32)

    vmem = pl.BlockSpec(memory_space=pltpu.MemorySpace.VMEM)
    smem = pl.BlockSpec(memory_space=pltpu.MemorySpace.SMEM)

    v_pad, s_pad, out_pad = pl.pallas_call(
        functools.partial(csi_kernel, alpha=float(alpha), Bp=Bp, T=T, H=H),
        out_shape=(jax.ShapeDtypeStruct((Bp, LANE), jnp.float32),
                   jax.ShapeDtypeStruct((N, LANE), jnp.float32),
                   jax.ShapeDtypeStruct((Bp, LANE), jnp.float32)),
        in_specs=[vmem] * 22 + [smem, smem],
        out_specs=(vmem, vmem, vmem),
        scratch_shapes=[pltpu.VMEM((T * Bp, LANE), jnp.float32)],
    )(x_tm, lengths2d, src2d, y_flat,
      prep["wa"], prep["ba"], prep["ln1w"], prep["ln1b"],
      prep["wih_p"], prep["whh_p"], prep["bg_p"], prep["ln2w"], prep["ln2b"],
      prep["wr_p"], prep["br_p"],
      prep["wu"], prep["bu"], prep["lnuw"], prep["lnub"],
      prep["ws_p"], prep["bs_p"],
      prep["wv_p"], prep["wp"], prep["bint"])

    return out_pad[:B, 0], s_pad[:, :1], v_pad[:B, :Dv]


# -------------------------------------------------------- pure-JAX reference
def csi_reference(params, x_t, lengths, y_flat, src_idx, alpha=1.0):
    def ln(x, w, b, eps=1e-5):
        m = jnp.mean(x, -1, keepdims=True)
        v = jnp.mean((x - m) ** 2, -1, keepdims=True)
        return (x - m) / jnp.sqrt(v + eps) * w + b

    B, T, _ = x_t.shape
    H = params["whh"].shape[0]
    Dv = params["wr"].shape[1]

    e = jnp.tanh(ln(x_t @ params["wa"] + params["ba"], params["ln1w"], params["ln1b"]))
    h = jnp.zeros((B, H), jnp.float32)
    c = jnp.zeros((B, H), jnp.float32)
    for t in range(T):
        gates = e[:, t, :] @ params["wih"] + h @ params["whh"] + params["bih"] + params["bhh"]
        i_g = jax.nn.sigmoid(gates[:, :H])
        f_g = jax.nn.sigmoid(gates[:, H:2 * H])
        g_g = jnp.tanh(gates[:, 2 * H:3 * H])
        o_g = jax.nn.sigmoid(gates[:, 3 * H:])
        c_new = f_g * c + i_g * g_g
        h_new = o_g * jnp.tanh(c_new)
        valid = (t < lengths)[:, None]
        h = jnp.where(valid, h_new, h)
        c = jnp.where(valid, c_new, c)
    v_j = jnp.tanh(ln(h, params["ln2w"], params["ln2b"]) @ params["wr"] + params["br"])

    y_t = jnp.tanh(ln(y_flat @ params["wu"] + params["bu"], params["lnuw"], params["lnub"]))
    s = jax.nn.sigmoid(y_t @ params["ws"] + params["bs"])
    s_flat = s[:, 0]
    sums = jax.ops.segment_sum(s_flat, src_idx, num_segments=B)
    counts = jax.ops.segment_sum(jnp.ones_like(s_flat), src_idx, num_segments=B)
    p_j = alpha * (sums / jnp.maximum(counts, 1.0))
    logits = v_j @ params["wint"][:Dv, :] + p_j[:, None] * params["wint"][Dv:, :] + params["bint"]
    return jax.nn.sigmoid(logits)[:, 0], s, v_j


# --------------------------------------------------------------------- init -
def init_params(key, Dx, E, H, Dv, Dy, Eu):
    ks = jax.random.split(key, 14)
    u = lambda k, shape: jax.random.uniform(k, shape, jnp.float32, -0.1, 0.1)
    return dict(
        # CaptureModule
        wa=u(ks[0], (Dx, E)), ba=u(ks[1], (1, E)),
        ln1w=jnp.ones((1, E), jnp.float32), ln1b=jnp.zeros((1, E), jnp.float32),
        wih=u(ks[2], (E, 4 * H)), whh=u(ks[3], (H, 4 * H)),
        bih=u(ks[4], (1, 4 * H)), bhh=u(ks[5], (1, 4 * H)),
        ln2w=jnp.ones((1, H), jnp.float32), ln2b=jnp.zeros((1, H), jnp.float32),
        wr=u(ks[6], (H, Dv)), br=u(ks[7], (1, Dv)),
        # ScoreModule
        wu=u(ks[8], (Dy, Eu)), bu=u(ks[9], (1, Eu)),
        lnuw=jnp.ones((1, Eu), jnp.float32), lnub=jnp.zeros((1, Eu), jnp.float32),
        ws=u(ks[10], (Eu, 1)), bs=u(ks[11], (1, 1)),
        # IntegrateModule (weight for cat(v_j, p_j), transposed -> (Dv+1, 1))
        wint=u(ks[12], (Dv + 1, 1)), bint=u(ks[13], (1, 1)),
    )


if __name__ == "__main__":
    B, T = 2, 8
    Dx, E, H, Dv = 16, 32, 32, 16          # dim_x_t, dim_embedding_wa, dim_hidden, dim_v_j
    Dy, Eu = 8, 16                         # dim_y_i, dim_embedding_wu
    N = 8                                  # total engaged users (flattened)

    key = jax.random.PRNGKey(0)
    k_p, k_x, k_y = jax.random.split(key, 3)
    params = init_params(k_p, Dx, E, H, Dv, Dy, Eu)
    prep = prepare_params(params)          # one-time weight padding / repacking

    x_t = jax.random.normal(k_x, (B, T, Dx), jnp.float32)
    lengths = jnp.array([8, 5], dtype=jnp.int32)
    y_flat = jax.random.normal(k_y, (N, Dy), jnp.float32)
    src_idx = jnp.array([0, 1, 0, 1, 0, 1, 1, 0], dtype=jnp.int32)

    out, s_is, v_j = csi_forward(prep, x_t, lengths, y_flat, src_idx, alpha=1.0)
    jax.block_until_ready((out, s_is, v_j))

    out_r, s_r, v_r = csi_reference(params, x_t, lengths, y_flat, src_idx, alpha=1.0)
    assert out.shape == (B,) and s_is.shape == (N, 1) and v_j.shape == (B, Dv)
    assert jnp.allclose(out, out_r, atol=1e-2, rtol=1e-2)
    assert jnp.allclose(s_is, s_r, atol=1e-2, rtol=1e-2)
    assert jnp.allclose(v_j, v_r, atol=1e-2, rtol=1e-2)

    print("KERNEL_OK")
</pallas_src>

<mosaic_0001>
module attributes {stable_mosaic.version = 11 : i64} {
  func.func @csi_kernel(%arg0: memref<64x16xf32, #tpu.memory_space<vmem>>, %arg1: memref<8x1xi32, #tpu.memory_space<vmem>>, %arg2: memref<1x8xi32, #tpu.memory_space<vmem>>, %arg3: memref<8x8xf32, #tpu.memory_space<vmem>>, %arg4: memref<16x32xf32, #tpu.memory_space<vmem>>, %arg5: memref<1x32xf32, #tpu.memory_space<vmem>>, %arg6: memref<1x32xf32, #tpu.memory_space<vmem>>, %arg7: memref<1x32xf32, #tpu.memory_space<vmem>>, %arg8: memref<32x128xf32, #tpu.memory_space<vmem>>, %arg9: memref<128x128xf32, #tpu.memory_space<vmem>>, %arg10: memref<1x128xf32, #tpu.memory_space<vmem>>, %arg11: memref<1x32xf32, #tpu.memory_space<vmem>>, %arg12: memref<1x32xf32, #tpu.memory_space<vmem>>, %arg13: memref<32x128xf32, #tpu.memory_space<vmem>>, %arg14: memref<1x128xf32, #tpu.memory_space<vmem>>, %arg15: memref<8x16xf32, #tpu.memory_space<vmem>>, %arg16: memref<1x16xf32, #tpu.memory_space<vmem>>, %arg17: memref<1x16xf32, #tpu.memory_space<vmem>>, %arg18: memref<1x16xf32, #tpu.memory_space<vmem>>, %arg19: memref<16x128xf32, #tpu.memory_space<vmem>>, %arg20: memref<1x128xf32, #tpu.memory_space<vmem>>, %arg21: memref<128x1xf32, #tpu.memory_space<vmem>>, %arg22: memref<1x1xf32, #tpu.memory_space<smem>>, %arg23: memref<1x1xf32, #tpu.memory_space<smem>>, %arg24: memref<8x128xf32, #tpu.memory_space<vmem>>, %arg25: memref<8x128xf32, #tpu.memory_space<vmem>>, %arg26: memref<8x128xf32, #tpu.memory_space<vmem>>, %arg27: memref<64x128xf32, #tpu.memory_space<vmem>>) attributes {dimension_semantics = [], scalar_prefetch = 0 : i64, scratch_operands = 1 : i64, tpu.core_type = #tpu.core_type<tc>} {
    %c0 = arith.constant 0 : index
    %c0_0 = arith.constant 0 : index
    %0 = vector.load %arg0[%c0, %c0_0] : memref<64x16xf32, #tpu.memory_space<vmem>>, vector<64x16xf32>
    %c0_1 = arith.constant 0 : index
    %c0_2 = arith.constant 0 : index
    %1 = vector.load %arg4[%c0_1, %c0_2] : memref<16x32xf32, #tpu.memory_space<vmem>>, vector<16x32xf32>
    %cst = arith.constant dense<0.000000e+00> : vector<64x32xf32>
    %2 = tpu.matmul %0, %1, %cst {dimension_numbers = #tpu.dot_dimension_numbers<[1], [0], [0], [1], [0, 0, 1, 1], [], []>} : vector<64x16xf32>, vector<16x32xf32>, vector<64x32xf32> -> vector<64x32xf32>
    %c0_3 = arith.constant 0 : index
    %c0_4 = arith.constant 0 : index
    %3 = vector.load %arg5[%c0_3, %c0_4] : memref<1x32xf32, #tpu.memory_space<vmem>>, vector<1x32xf32>
    %4 = vector.broadcast %3 : vector<1x32xf32> to vector<64x32xf32>
    %5 = arith.addf %2, %4 : vector<64x32xf32>
    %c0_5 = arith.constant 0 : index
    %c0_6 = arith.constant 0 : index
    %6 = vector.load %arg6[%c0_5, %c0_6] : memref<1x32xf32, #tpu.memory_space<vmem>>, vector<1x32xf32>
    %c0_7 = arith.constant 0 : index
    %c0_8 = arith.constant 0 : index
    %7 = vector.load %arg7[%c0_7, %c0_8] : memref<1x32xf32, #tpu.memory_space<vmem>>, vector<1x32xf32>
    %cst_9 = arith.constant dense<0.000000e+00> : vector<64xf32>
    %8 = vector.multi_reduction <add>, %5, %cst_9 [1] : vector<64x32xf32> to vector<64xf32>
    %9 = vector.shape_cast %8 : vector<64xf32> to vector<64x1xf32>
    %cst_10 = arith.constant 3.200000e+01 : f32
    %10 = vector.broadcast %cst_10 : f32 to vector<64x1xf32>
    %11 = arith.divf %9, %10 : vector<64x1xf32>
    %12 = vector.broadcast %11 : vector<64x1xf32> to vector<64x32xf32>
    %13 = arith.subf %5, %12 : vector<64x32xf32>
    %14 = arith.mulf %13, %13 : vector<64x32xf32>
    %cst_11 = arith.constant dense<0.000000e+00> : vector<64xf32>
    %15 = vector.multi_reduction <add>, %14, %cst_11 [1] : vector<64x32xf32> to vector<64xf32>
    %16 = vector.shape_cast %15 : vector<64xf32> to vector<64x1xf32>
    %cst_12 = arith.constant 3.200000e+01 : f32
    %17 = vector.broadcast %cst_12 : f32 to vector<64x1xf32>
    %18 = arith.divf %16, %17 : vector<64x1xf32>
    %19 = vector.broadcast %11 : vector<64x1xf32> to vector<64x32xf32>
    %20 = arith.subf %5, %19 : vector<64x32xf32>
    %cst_13 = arith.constant 9.99999974E-6 : f32
    %21 = vector.broadcast %cst_13 : f32 to vector<64x1xf32>
    %22 = arith.addf %18, %21 : vector<64x1xf32>
    %23 = math.rsqrt %22 : vector<64x1xf32>
    %24 = vector.broadcast %23 : vector<64x1xf32> to vector<64x32xf32>
    %25 = arith.mulf %20, %24 : vector<64x32xf32>
    %26 = vector.broadcast %6 : vector<1x32xf32> to vector<64x32xf32>
    %27 = arith.mulf %25, %26 : vector<64x32xf32>
    %28 = vector.broadcast %7 : vector<1x32xf32> to vector<64x32xf32>
    %29 = arith.addf %27, %28 : vector<64x32xf32>
    %30 = math.tanh %29 : vector<64x32xf32>
    %c0_14 = arith.constant 0 : index
    %c0_15 = arith.constant 0 : index
    %31 = vector.load %arg8[%c0_14, %c0_15] : memref<32x128xf32, #tpu.memory_space<vmem>>, vector<32x128xf32>
    %cst_16 = arith.constant dense<0.000000e+00> : vector<64x128xf32>
    %32 = tpu.matmul %30, %31, %cst_16 {dimension_numbers = #tpu.dot_dimension_numbers<[1], [0], [0], [1], [0, 0, 1, 1], [], []>} : vector<64x32xf32>, vector<32x128xf32>, vector<64x128xf32> -> vector<64x128xf32>
    %c0_17 = arith.constant 0 : index
    %c0_18 = arith.constant 0 : index
    %33 = vector.load %arg10[%c0_17, %c0_18] : memref<1x128xf32, #tpu.memory_space<vmem>>, vector<1x128xf32>
    %34 = vector.broadcast %33 : vector<1x128xf32> to vector<64x128xf32>
    %35 = arith.addf %32, %34 : vector<64x128xf32>
    %c0_19 = arith.constant 0 : index
    %c0_20 = arith.constant 0 : index
    %36 = vector.load %arg27[%c0_19, %c0_20] : memref<64x128xf32, #tpu.memory_space<vmem>>, vector<64x128xf32>
    tpu.vector_store %arg27[%c0_19, %c0_20], %35 {strides = array<i32>} : memref<64x128xf32, #tpu.memory_space<vmem>>, vector<64x128xf32>,
    %c0_21 = arith.constant 0 : index
    %c0_22 = arith.constant 0 : index
    %37 = vector.load %arg1[%c0_21, %c0_22] : memref<8x1xi32, #tpu.memory_space<vmem>>, vector<8x1xi32>
    %38 = tpu.iota {dimensions = array<i32: 1>} : vector<8x128xi32>
    %c64_i32 = arith.constant 64 : i32
    %39 = vector.broadcast %c64_i32 : i32 to vector<8x128xi32>
    %40 = arith.cmpi sge, %38, %39 : vector<8x128xi32>
    %c96_i32 = arith.constant 96 : i32
    %41 = vector.broadcast %c96_i32 : i32 to vector<8x128xi32>
    %42 = arith.cmpi slt, %38, %41 : vector<8x128xi32>
    %43 = arith.andi %40, %42 : vector<8x128xi1>
    %cst_23 = arith.constant 0.000000e+00 : f32
    %44 = vector.broadcast %cst_23 : f32 to vector<8x128xf32>
    %cst_24 = arith.constant 0.000000e+00 : f32
    %45 = vector.broadcast %cst_24 : f32 to vector<8x128xf32>
    %c0_i32 = arith.constant 0 : i32
    %c8_i32 = arith.constant 8 : i32
    %46 = arith.muli %c0_i32, %c8_i32 : i32
    %47 = tpu.assume_multiple %46, 8 : i32
    %48 = arith.index_cast %47 : i32 to index
    %c0_25 = arith.constant 0 : index
    %49 = vector.load %arg27[%48, %c0_25] : memref<64x128xf32, #tpu.memory_space<vmem>>, vector<8x128xf32>
    %c0_26 = arith.constant 0 : index
    %c0_27 = arith.constant 0 : index
    %50 = vector.load %arg9[%c0_26, %c0_27] : memref<128x128xf32, #tpu.memory_space<vmem>>, vector<128x128xf32>
    %cst_28 = arith.constant dense<0.000000e+00> : vector<8x128xf32>
    %51 = tpu.matmul %44, %50, %cst_28 {dimension_numbers = #tpu.dot_dimension_numbers<[1], [0], [0], [1], [0, 0, 1, 1], [], []>} : vector<8x128xf32>, vector<128x128xf32>, vector<8x128xf32> -> vector<8x128xf32>
    %52 = arith.addf %51, %49 : vector<8x128xf32>
    %53 = math.tanh %52 : vector<8x128xf32>
    %54 = arith.negf %52 : vector<8x128xf32>
    %55 = math.exp %54 : vector<8x128xf32>
    %cst_29 = arith.constant 1.000000e+00 : f32
    %56 = vector.broadcast %cst_29 : f32 to vector<8x128xf32>
    %57 = arith.addf %56, %55 : vector<8x128xf32>
    %58 = arith.divf %56, %57 : vector<8x128xf32>
    %59 = arith.select %43, %53, %58 : vector<8x128xi1>, vector<8x128xf32>
    %c96_i32_30 = arith.constant 96 : i32
    %60 = tpu.dynamic_rotate %59 by %c96_i32_30 dim 1 : vector<8x128xf32>, i32 -> vector<8x128xf32>
    %c64_i32_31 = arith.constant 64 : i32
    %61 = tpu.dynamic_rotate %59 by %c64_i32_31 dim 1 : vector<8x128xf32>, i32 -> vector<8x128xf32>
    %c32_i32 = arith.constant 32 : i32
    %62 = tpu.dynamic_rotate %59 by %c32_i32 dim 1 : vector<8x128xf32>, i32 -> vector<8x128xf32>
    %63 = arith.mulf %60, %45 : vector<8x128xf32>
    %64 = arith.mulf %59, %61 : vector<8x128xf32>
    %65 = arith.addf %63, %64 : vector<8x128xf32>
    %66 = math.tanh %65 : vector<8x128xf32>
    %67 = arith.mulf %62, %66 : vector<8x128xf32>
    %68 = vector.broadcast %c0_i32 : i32 to vector<8x1xi32>
    %69 = arith.cmpi slt, %68, %37 : vector<8x1xi32>
    %70 = vector.shape_cast %69 : vector<8x1xi1> to vector<8x1xi1>
    %71 = vector.broadcast %70 : vector<8x1xi1> to vector<8x128xi1>
    %72 = arith.select %71, %67, %44 : vector<8x128xi1>, vector<8x128xf32>
    %73 = vector.shape_cast %69 : vector<8x1xi1> to vector<8x1xi1>
    %74 = vector.broadcast %73 : vector<8x1xi1> to vector<8x128xi1>
    %75 = arith.select %74, %65, %45 : vector<8x128xi1>, vector<8x128xf32>
    %c1_i32 = arith.constant 1 : i32
    %c8_i32_32 = arith.constant 8 : i32
    %76 = arith.muli %c1_i32, %c8_i32_32 : i32
    %77 = tpu.assume_multiple %76, 8 : i32
    %78 = arith.index_cast %77 : i32 to index
    %c0_33 = arith.constant 0 : index
    %79 = vector.load %arg27[%78, %c0_33] : memref<64x128xf32, #tpu.memory_space<vmem>>, vector<8x128xf32>
    %c0_34 = arith.constant 0 : index
    %c0_35 = arith.constant 0 : index
    %80 = vector.load %arg9[%c0_34, %c0_35] : memref<128x128xf32, #tpu.memory_space<vmem>>, vector<128x128xf32>
    %cst_36 = arith.constant dense<0.000000e+00> : vector<8x128xf32>
    %81 = tpu.matmul %72, %80, %cst_36 {dimension_numbers = #tpu.dot_dimension_numbers<[1], [0], [0], [1], [0, 0, 1, 1], [], []>} : vector<8x128xf32>, vector<128x128xf32>, vector<8x128xf32> -> vector<8x128xf32>
    %82 = arith.addf %81, %79 : vector<8x128xf32>
    %83 = math.tanh %82 : vector<8x128xf32>
    %84 = arith.negf %82 : vector<8x128xf32>
    %85 = math.exp %84 : vector<8x128xf32>
    %cst_37 = arith.constant 1.000000e+00 : f32
    %86 = vector.broadcast %cst_37 : f32 to vector<8x128xf32>
    %87 = arith.addf %86, %85 : vector<8x128xf32>
    %88 = arith.divf %86, %87 : vector<8x128xf32>
    %89 = arith.select %43, %83, %88 : vector<8x128xi1>, vector<8x128xf32>
    %c96_i32_38 = arith.constant 96 : i32
    %90 = tpu.dynamic_rotate %89 by %c96_i32_38 dim 1 : vector<8x128xf32>, i32 -> vector<8x128xf32>
    %c64_i32_39 = arith.constant 64 : i32
    %91 = tpu.dynamic_rotate %89 by %c64_i32_39 dim 1 : vector<8x128xf32>, i32 -> vector<8x128xf32>
    %c32_i32_40 = arith.constant 32 : i32
    %92 = tpu.dynamic_rotate %89 by %c32_i32_40 dim 1 : vector<8x128xf32>, i32 -> vector<8x128xf32>
    %93 = arith.mulf %90, %75 : vector<8x128xf32>
    %94 = arith.mulf %89, %91 : vector<8x128xf32>
    %95 = arith.addf %93, %94 : vector<8x128xf32>
    %96 = math.tanh %95 : vector<8x128xf32>
    %97 = arith.mulf %92, %96 : vector<8x128xf32>
    %98 = vector.broadcast %c1_i32 : i32 to vector<8x1xi32>
    %99 = arith.cmpi slt, %98, %37 : vector<8x1xi32>
    %100 = vector.shape_cast %99 : vector<8x1xi1> to vector<8x1xi1>
    %101 = vector.broadcast %100 : vector<8x1xi1> to vector<8x128xi1>
    %102 = arith.select %101, %97, %72 : vector<8x128xi1>, vector<8x128xf32>
    %103 = vector.shape_cast %99 : vector<8x1xi1> to vector<8x1xi1>
    %104 = vector.broadcast %103 : vector<8x1xi1> to vector<8x128xi1>
    %105 = arith.select %104, %95, %75 : vector<8x128xi1>, vector<8x128xf32>
    %c2_i32 = arith.constant 2 : i32
    %c8_i32_41 = arith.constant 8 : i32
    %106 = arith.muli %c2_i32, %c8_i32_41 : i32
    %107 = tpu.assume_multiple %106, 8 : i32
    %108 = arith.index_cast %107 : i32 to index
    %c0_42 = arith.constant 0 : index
    %109 = vector.load %arg27[%108, %c0_42] : memref<64x128xf32, #tpu.memory_space<vmem>>, vector<8x128xf32>
    %c0_43 = arith.constant 0 : index
    %c0_44 = arith.constant 0 : index
    %110 = vector.load %arg9[%c0_43, %c0_44] : memref<128x128xf32, #tpu.memory_space<vmem>>, vector<128x128xf32>
    %cst_45 = arith.constant dense<0.000000e+00> : vector<8x128xf32>
    %111 = tpu.matmul %102, %110, %cst_45 {dimension_numbers = #tpu.dot_dimension_numbers<[1], [0], [0], [1], [0, 0, 1, 1], [], []>} : vector<8x128xf32>, vector<128x128xf32>, vector<8x128xf32> -> vector<8x128xf32>
    %112 = arith.addf %111, %109 : vector<8x128xf32>
    %113 = math.tanh %112 : vector<8x128xf32>
    %114 = arith.negf %112 : vector<8x128xf32>
    %115 = math.exp %114 : vector<8x128xf32>
    %cst_46 = arith.constant 1.000000e+00 : f32
    %116 = vector.broadcast %cst_46 : f32 to vector<8x128xf32>
    %117 = arith.addf %116, %115 : vector<8x128xf32>
    %118 = arith.divf %116, %117 : vector<8x128xf32>
    %119 = arith.select %43, %113, %118 : vector<8x128xi1>, vector<8x128xf32>
    %c96_i32_47 = arith.constant 96 : i32
    %120 = tpu.dynamic_rotate %119 by %c96_i32_47 dim 1 : vector<8x128xf32>, i32 -> vector<8x128xf32>
    %c64_i32_48 = arith.constant 64 : i32
    %121 = tpu.dynamic_rotate %119 by %c64_i32_48 dim 1 : vector<8x128xf32>, i32 -> vector<8x128xf32>
    %c32_i32_49 = arith.constant 32 : i32
    %122 = tpu.dynamic_rotate %119 by %c32_i32_49 dim 1 : vector<8x128xf32>, i32 -> vector<8x128xf32>
    %123 = arith.mulf %120, %105 : vector<8x128xf32>
    %124 = arith.mulf %119, %121 : vector<8x128xf32>
    %125 = arith.addf %123, %124 : vector<8x128xf32>
    %126 = math.tanh %125 : vector<8x128xf32>
    %127 = arith.mulf %122, %126 : vector<8x128xf32>
    %128 = vector.broadcast %c2_i32 : i32 to vector<8x1xi32>
    %129 = arith.cmpi slt, %128, %37 : vector<8x1xi32>
    %130 = vector.shape_cast %129 : vector<8x1xi1> to vector<8x1xi1>
    %131 = vector.broadcast %130 : vector<8x1xi1> to vector<8x128xi1>
    %132 = arith.select %131, %127, %102 : vector<8x128xi1>, vector<8x128xf32>
    %133 = vector.shape_cast %129 : vector<8x1xi1> to vector<8x1xi1>
    %134 = vector.broadcast %133 : vector<8x1xi1> to vector<8x128xi1>
    %135 = arith.select %134, %125, %105 : vector<8x128xi1>, vector<8x128xf32>
    %c3_i32 = arith.constant 3 : i32
    %c8_i32_50 = arith.constant 8 : i32
    %136 = arith.muli %c3_i32, %c8_i32_50 : i32
    %137 = tpu.assume_multiple %136, 8 : i32
    %138 = arith.index_cast %137 : i32 to index
    %c0_51 = arith.constant 0 : index
    %139 = vector.load %arg27[%138, %c0_51] : memref<64x128xf32, #tpu.memory_space<vmem>>, vector<8x128xf32>
    %c0_52 = arith.constant 0 : index
    %c0_53 = arith.constant 0 : index
    %140 = vector.load %arg9[%c0_52, %c0_53] : memref<128x128xf32, #tpu.memory_space<vmem>>, vector<128x128xf32>
    %cst_54 = arith.constant dense<0.000000e+00> : vector<8x128xf32>
    %141 = tpu.matmul %132, %140, %cst_54 {dimension_numbers = #tpu.dot_dimension_numbers<[1], [0], [0], [1], [0, 0, 1, 1], [], []>} : vector<8x128xf32>, vector<128x128xf32>, vector<8x128xf32> -> vector<8x128xf32>
    %142 = arith.addf %141, %139 : vector<8x128xf32>
    %143 = math.tanh %142 : vector<8x128xf32>
    %144 = arith.negf %142 : vector<8x128xf32>
    %145 = math.exp %144 : vector<8x128xf32>
    %cst_55 = arith.constant 1.000000e+00 : f32
    %146 = vector.broadcast %cst_55 : f32 to vector<8x128xf32>
    %147 = arith.addf %146, %145 : vector<8x128xf32>
    %148 = arith.divf %146, %147 : vector<8x128xf32>
    %149 = arith.select %43, %143, %148 : vector<8x128xi1>, vector<8x128xf32>
    %c96_i32_56 = arith.constant 96 : i32
    %150 = tpu.dynamic_rotate %149 by %c96_i32_56 dim 1 : vector<8x128xf32>, i32 -> vector<8x128xf32>
    %c64_i32_57 = arith.constant 64 : i32
    %151 = tpu.dynamic_rotate %149 by %c64_i32_57 dim 1 : vector<8x128xf32>, i32 -> vector<8x128xf32>
    %c32_i32_58 = arith.constant 32 : i32
    %152 = tpu.dynamic_rotate %149 by %c32_i32_58 dim 1 : vector<8x128xf32>, i32 -> vector<8x128xf32>
    %153 = arith.mulf %150, %135 : vector<8x128xf32>
    %154 = arith.mulf %149, %151 : vector<8x128xf32>
    %155 = arith.addf %153, %154 : vector<8x128xf32>
    %156 = math.tanh %155 : vector<8x128xf32>
    %157 = arith.mulf %152, %156 : vector<8x128xf32>
    %158 = vector.broadcast %c3_i32 : i32 to vector<8x1xi32>
    %159 = arith.cmpi slt, %158, %37 : vector<8x1xi32>
    %160 = vector.shape_cast %159 : vector<8x1xi1> to vector<8x1xi1>
    %161 = vector.broadcast %160 : vector<8x1xi1> to vector<8x128xi1>
    %162 = arith.select %161, %157, %132 : vector<8x128xi1>, vector<8x128xf32>
    %163 = vector.shape_cast %159 : vector<8x1xi1> to vector<8x1xi1>
    %164 = vector.broadcast %163 : vector<8x1xi1> to vector<8x128xi1>
    %165 = arith.select %164, %155, %135 : vector<8x128xi1>, vector<8x128xf32>
    %c4_i32 = arith.constant 4 : i32
    %c8_i32_59 = arith.constant 8 : i32
    %166 = arith.muli %c4_i32, %c8_i32_59 : i32
    %167 = tpu.assume_multiple %166, 8 : i32
    %168 = arith.index_cast %167 : i32 to index
    %c0_60 = arith.constant 0 : index
    %169 = vector.load %arg27[%168, %c0_60] : memref<64x128xf32, #tpu.memory_space<vmem>>, vector<8x128xf32>
    %c0_61 = arith.constant 0 : index
    %c0_62 = arith.constant 0 : index
    %170 = vector.load %arg9[%c0_61, %c0_62] : memref<128x128xf32, #tpu.memory_space<vmem>>, vector<128x128xf32>
    %cst_63 = arith.constant dense<0.000000e+00> : vector<8x128xf32>
    %171 = tpu.matmul %162, %170, %cst_63 {dimension_numbers = #tpu.dot_dimension_numbers<[1], [0], [0], [1], [0, 0, 1, 1], [], []>} : vector<8x128xf32>, vector<128x128xf32>, vector<8x128xf32> -> vector<8x128xf32>
    %172 = arith.addf %171, %169 : vector<8x128xf32>
    %173 = math.tanh %172 : vector<8x128xf32>
    %174 = arith.negf %172 : vector<8x128xf32>
    %175 = math.exp %174 : vector<8x128xf32>
    %cst_64 = arith.constant 1.000000e+00 : f32
    %176 = vector.broadcast %cst_64 : f32 to vector<8x128xf32>
    %177 = arith.addf %176, %175 : vector<8x128xf32>
    %178 = arith.divf %176, %177 : vector<8x128xf32>
    %179 = arith.select %43, %173, %178 : vector<8x128xi1>, vector<8x128xf32>
    %c96_i32_65 = arith.constant 96 : i32
    %180 = tpu.dynamic_rotate %179 by %c96_i32_65 dim 1 : vector<8x128xf32>, i32 -> vector<8x128xf32>
    %c64_i32_66 = arith.constant 64 : i32
    %181 = tpu.dynamic_rotate %179 by %c64_i32_66 dim 1 : vector<8x128xf32>, i32 -> vector<8x128xf32>
    %c32_i32_67 = arith.constant 32 : i32
    %182 = tpu.dynamic_rotate %179 by %c32_i32_67 dim 1 : vector<8x128xf32>, i32 -> vector<8x128xf32>
    %183 = arith.mulf %180, %165 : vector<8x128xf32>
    %184 = arith.mulf %179, %181 : vector<8x128xf32>
    %185 = arith.addf %183, %184 : vector<8x128xf32>
    %186 = math.tanh %185 : vector<8x128xf32>
    %187 = arith.mulf %182, %186 : vector<8x128xf32>
    %188 = vector.broadcast %c4_i32 : i32 to vector<8x1xi32>
    %189 = arith.cmpi slt, %188, %37 : vector<8x1xi32>
    %190 = vector.shape_cast %189 : vector<8x1xi1> to vector<8x1xi1>
    %191 = vector.broadcast %190 : vector<8x1xi1> to vector<8x128xi1>
    %192 = arith.select %191, %187, %162 : vector<8x128xi1>, vector<8x128xf32>
    %193 = vector.shape_cast %189 : vector<8x1xi1> to vector<8x1xi1>
    %194 = vector.broadcast %193 : vector<8x1xi1> to vector<8x128xi1>
    %195 = arith.select %194, %185, %165 : vector<8x128xi1>, vector<8x128xf32>
    %c5_i32 = arith.constant 5 : i32
    %c8_i32_68 = arith.constant 8 : i32
    %196 = arith.muli %c5_i32, %c8_i32_68 : i32
    %197 = tpu.assume_multiple %196, 8 : i32
    %198 = arith.index_cast %197 : i32 to index
    %c0_69 = arith.constant 0 : index
    %199 = vector.load %arg27[%198, %c0_69] : memref<64x128xf32, #tpu.memory_space<vmem>>, vector<8x128xf32>
    %c0_70 = arith.constant 0 : index
    %c0_71 = arith.constant 0 : index
    %200 = vector.load %arg9[%c0_70, %c0_71] : memref<128x128xf32, #tpu.memory_space<vmem>>, vector<128x128xf32>
    %cst_72 = arith.constant dense<0.000000e+00> : vector<8x128xf32>
    %201 = tpu.matmul %192, %200, %cst_72 {dimension_numbers = #tpu.dot_dimension_numbers<[1], [0], [0], [1], [0, 0, 1, 1], [], []>} : vector<8x128xf32>, vector<128x128xf32>, vector<8x128xf32> -> vector<8x128xf32>
    %202 = arith.addf %201, %199 : vector<8x128xf32>
    %203 = math.tanh %202 : vector<8x128xf32>
    %204 = arith.negf %202 : vector<8x128xf32>
    %205 = math.exp %204 : vector<8x128xf32>
    %cst_73 = arith.constant 1.000000e+00 : f32
    %206 = vector.broadcast %cst_73 : f32 to vector<8x128xf32>
    %207 = arith.addf %206, %205 : vector<8x128xf32>
    %208 = arith.divf %206, %207 : vector<8x128xf32>
    %209 = arith.select %43, %203, %208 : vector<8x128xi1>, vector<8x128xf32>
    %c96_i32_74 = arith.constant 96 : i32
    %210 = tpu.dynamic_rotate %209 by %c96_i32_74 dim 1 : vector<8x128xf32>, i32 -> vector<8x128xf32>
    %c64_i32_75 = arith.constant 64 : i32
    %211 = tpu.dynamic_rotate %209 by %c64_i32_75 dim 1 : vector<8x128xf32>, i32 -> vector<8x128xf32>
    %c32_i32_76 = arith.constant 32 : i32
    %212 = tpu.dynamic_rotate %209 by %c32_i32_76 dim 1 : vector<8x128xf32>, i32 -> vector<8x128xf32>
    %213 = arith.mulf %210, %195 : vector<8x128xf32>
    %214 = arith.mulf %209, %211 : vector<8x128xf32>
    %215 = arith.addf %213, %214 : vector<8x128xf32>
    %216 = math.tanh %215 : vector<8x128xf32>
    %217 = arith.mulf %212, %216 : vector<8x128xf32>
    %218 = vector.broadcast %c5_i32 : i32 to vector<8x1xi32>
    %219 = arith.cmpi slt, %218, %37 : vector<8x1xi32>
    %220 = vector.shape_cast %219 : vector<8x1xi1> to vector<8x1xi1>
    %221 = vector.broadcast %220 : vector<8x1xi1> to vector<8x128xi1>
    %222 = arith.select %221, %217, %192 : vector<8x128xi1>, vector<8x128xf32>
    %223 = vector.shape_cast %219 : vector<8x1xi1> to vector<8x1xi1>
    %224 = vector.broadcast %223 : vector<8x1xi1> to vector<8x128xi1>
    %225 = arith.select %224, %215, %195 : vector<8x128xi1>, vector<8x128xf32>
    %c6_i32 = arith.constant 6 : i32
    %c8_i32_77 = arith.constant 8 : i32
    %226 = arith.muli %c6_i32, %c8_i32_77 : i32
    %227 = tpu.assume_multiple %226, 8 : i32
    %228 = arith.index_cast %227 : i32 to index
    %c0_78 = arith.constant 0 : index
    %229 = vector.load %arg27[%228, %c0_78] : memref<64x128xf32, #tpu.memory_space<vmem>>, vector<8x128xf32>
    %c0_79 = arith.constant 0 : index
    %c0_80 = arith.constant 0 : index
    %230 = vector.load %arg9[%c0_79, %c0_80] : memref<128x128xf32, #tpu.memory_space<vmem>>, vector<128x128xf32>
    %cst_81 = arith.constant dense<0.000000e+00> : vector<8x128xf32>
    %231 = tpu.matmul %222, %230, %cst_81 {dimension_numbers = #tpu.dot_dimension_numbers<[1], [0], [0], [1], [0, 0, 1, 1], [], []>} : vector<8x128xf32>, vector<128x128xf32>, vector<8x128xf32> -> vector<8x128xf32>
    %232 = arith.addf %231, %229 : vector<8x128xf32>
    %233 = math.tanh %232 : vector<8x128xf32>
    %234 = arith.negf %232 : vector<8x128xf32>
    %235 = math.exp %234 : vector<8x128xf32>
    %cst_82 = arith.constant 1.000000e+00 : f32
    %236 = vector.broadcast %cst_82 : f32 to vector<8x128xf32>
    %237 = arith.addf %236, %235 : vector<8x128xf32>
    %238 = arith.divf %236, %237 : vector<8x128xf32>
    %239 = arith.select %43, %233, %238 : vector<8x128xi1>, vector<8x128xf32>
    %c96_i32_83 = arith.constant 96 : i32
    %240 = tpu.dynamic_rotate %239 by %c96_i32_83 dim 1 : vector<8x128xf32>, i32 -> vector<8x128xf32>
    %c64_i32_84 = arith.constant 64 : i32
    %241 = tpu.dynamic_rotate %239 by %c64_i32_84 dim 1 : vector<8x128xf32>, i32 -> vector<8x128xf32>
    %c32_i32_85 = arith.constant 32 : i32
    %242 = tpu.dynamic_rotate %239 by %c32_i32_85 dim 1 : vector<8x128xf32>, i32 -> vector<8x128xf32>
    %243 = arith.mulf %240, %225 : vector<8x128xf32>
    %244 = arith.mulf %239, %241 : vector<8x128xf32>
    %245 = arith.addf %243, %244 : vector<8x128xf32>
    %246 = math.tanh %245 : vector<8x128xf32>
    %247 = arith.mulf %242, %246 : vector<8x128xf32>
    %248 = vector.broadcast %c6_i32 : i32 to vector<8x1xi32>
    %249 = arith.cmpi slt, %248, %37 : vector<8x1xi32>
    %250 = vector.shape_cast %249 : vector<8x1xi1> to vector<8x1xi1>
    %251 = vector.broadcast %250 : vector<8x1xi1> to vector<8x128xi1>
    %252 = arith.select %251, %247, %222 : vector<8x128xi1>, vector<8x128xf32>
    %253 = vector.shape_cast %249 : vector<8x1xi1> to vector<8x1xi1>
    %254 = vector.broadcast %253 : vector<8x1xi1> to vector<8x128xi1>
    %255 = arith.select %254, %245, %225 : vector<8x128xi1>, vector<8x128xf32>
    %c7_i32 = arith.constant 7 : i32
    %c8_i32_86 = arith.constant 8 : i32
    %256 = arith.muli %c7_i32, %c8_i32_86 : i32
    %257 = tpu.assume_multiple %256, 8 : i32
    %258 = arith.index_cast %257 : i32 to index
    %c0_87 = arith.constant 0 : index
    %259 = vector.load %arg27[%258, %c0_87] : memref<64x128xf32, #tpu.memory_space<vmem>>, vector<8x128xf32>
    %c0_88 = arith.constant 0 : index
    %c0_89 = arith.constant 0 : index
    %260 = vector.load %arg9[%c0_88, %c0_89] : memref<128x128xf32, #tpu.memory_space<vmem>>, vector<128x128xf32>
    %cst_90 = arith.constant dense<0.000000e+00> : vector<8x128xf32>
    %261 = tpu.matmul %252, %260, %cst_90 {dimension_numbers = #tpu.dot_dimension_numbers<[1], [0], [0], [1], [0, 0, 1, 1], [], []>} : vector<8x128xf32>, vector<128x128xf32>, vector<8x128xf32> -> vector<8x128xf32>
    %262 = arith.addf %261, %259 : vector<8x128xf32>
    %263 = math.tanh %262 : vector<8x128xf32>
    %264 = arith.negf %262 : vector<8x128xf32>
    %265 = math.exp %264 : vector<8x128xf32>
    %cst_91 = arith.constant 1.000000e+00 : f32
    %266 = vector.broadcast %cst_91 : f32 to vector<8x128xf32>
    %267 = arith.addf %266, %265 : vector<8x128xf32>
    %268 = arith.divf %266, %267 : vector<8x128xf32>
    %269 = arith.select %43, %263, %268 : vector<8x128xi1>, vector<8x128xf32>
    %c96_i32_92 = arith.constant 96 : i32
    %270 = tpu.dynamic_rotate %269 by %c96_i32_92 dim 1 : vector<8x128xf32>, i32 -> vector<8x128xf32>
    %c64_i32_93 = arith.constant 64 : i32
    %271 = tpu.dynamic_rotate %269 by %c64_i32_93 dim 1 : vector<8x128xf32>, i32 -> vector<8x128xf32>
    %c32_i32_94 = arith.constant 32 : i32
    %272 = tpu.dynamic_rotate %269 by %c32_i32_94 dim 1 : vector<8x128xf32>, i32 -> vector<8x128xf32>
    %273 = arith.mulf %270, %255 : vector<8x128xf32>
    %274 = arith.mulf %269, %271 : vector<8x128xf32>
    %275 = arith.addf %273, %274 : vector<8x128xf32>
    %276 = math.tanh %275 : vector<8x128xf32>
    %277 = arith.mulf %272, %276 : vector<8x128xf32>
    %278 = vector.broadcast %c7_i32 : i32 to vector<8x1xi32>
    %279 = arith.cmpi slt, %278, %37 : vector<8x1xi32>
    %280 = vector.shape_cast %279 : vector<8x1xi1> to vector<8x1xi1>
    %281 = vector.broadcast %280 : vector<8x1xi1> to vector<8x128xi1>
    %282 = arith.select %281, %277, %252 : vector<8x128xi1>, vector<8x128xf32>
    %283 = vector.shape_cast %279 : vector<8x1xi1> to vector<8x1xi1>
    %284 = vector.broadcast %283 : vector<8x1xi1> to vector<8x128xi1>
    %285 = arith.select %284, %275, %255 : vector<8x128xi1>, vector<8x128xf32>
    %c8_i32_95 = arith.constant 8 : i32
    %286 = vector.extract_strided_slice %282 {offsets = [0, 0], sizes = [8, 32], strides = [1, 1]} : vector<8x128xf32> to vector<8x32xf32>
    %c0_96 = arith.constant 0 : index
    %c0_97 = arith.constant 0 : index
    %287 = vector.load %arg11[%c0_96, %c0_97] : memref<1x32xf32, #tpu.memory_space<vmem>>, vector<1x32xf32>
    %c0_98 = arith.constant 0 : index
    %c0_99 = arith.constant 0 : index
    %288 = vector.load %arg12[%c0_98, %c0_99] : memref<1x32xf32, #tpu.memory_space<vmem>>, vector<1x32xf32>
    %cst_100 = arith.constant dense<0.000000e+00> : vector<8xf32>
    %289 = vector.multi_reduction <add>, %286, %cst_100 [1] : vector<8x32xf32> to vector<8xf32>
    %290 = vector.shape_cast %289 : vector<8xf32> to vector<8x1xf32>
    %cst_101 = arith.constant 3.200000e+01 : f32
    %291 = vector.broadcast %cst_101 : f32 to vector<8x1xf32>
    %292 = arith.divf %290, %291 : vector<8x1xf32>
    %293 = vector.broadcast %292 : vector<8x1xf32> to vector<8x32xf32>
    %294 = arith.subf %286, %293 : vector<8x32xf32>
    %295 = arith.mulf %294, %294 : vector<8x32xf32>
    %cst_102 = arith.constant dense<0.000000e+00> : vector<8xf32>
    %296 = vector.multi_reduction <add>, %295, %cst_102 [1] : vector<8x32xf32> to vector<8xf32>
    %297 = vector.shape_cast %296 : vector<8xf32> to vector<8x1xf32>
    %cst_103 = arith.constant 3.200000e+01 : f32
    %298 = vector.broadcast %cst_103 : f32 to vector<8x1xf32>
    %299 = arith.divf %297, %298 : vector<8x1xf32>
    %300 = vector.broadcast %292 : vector<8x1xf32> to vector<8x32xf32>
    %301 = arith.subf %286, %300 : vector<8x32xf32>
    %cst_104 = arith.constant 9.99999974E-6 : f32
    %302 = vector.broadcast %cst_104 : f32 to vector<8x1xf32>
    %303 = arith.addf %299, %302 : vector<8x1xf32>
    %304 = math.rsqrt %303 : vector<8x1xf32>
    %305 = vector.broadcast %304 : vector<8x1xf32> to vector<8x32xf32>
    %306 = arith.mulf %301, %305 : vector<8x32xf32>
    %307 = vector.broadcast %287 : vector<1x32xf32> to vector<8x32xf32>
    %308 = arith.mulf %306, %307 : vector<8x32xf32>
    %309 = vector.broadcast %288 : vector<1x32xf32> to vector<8x32xf32>
    %310 = arith.addf %308, %309 : vector<8x32xf32>
    %c0_105 = arith.constant 0 : index
    %c0_106 = arith.constant 0 : index
    %311 = vector.load %arg13[%c0_105, %c0_106] : memref<32x128xf32, #tpu.memory_space<vmem>>, vector<32x128xf32>
    %cst_107 = arith.constant dense<0.000000e+00> : vector<8x128xf32>
    %312 = tpu.matmul %310, %311, %cst_107 {dimension_numbers = #tpu.dot_dimension_numbers<[1], [0], [0], [1], [0, 0, 1, 1], [], []>} : vector<8x32xf32>, vector<32x128xf32>, vector<8x128xf32> -> vector<8x128xf32>
    %c0_108 = arith.constant 0 : index
    %c0_109 = arith.constant 0 : index
    %313 = vector.load %arg14[%c0_108, %c0_109] : memref<1x128xf32, #tpu.memory_space<vmem>>, vector<1x128xf32>
    %314 = vector.broadcast %313 : vector<1x128xf32> to vector<8x128xf32>
    %315 = arith.addf %312, %314 : vector<8x128xf32>
    %316 = math.tanh %315 : vector<8x128xf32>
    %c0_110 = arith.constant 0 : index
    %c0_111 = arith.constant 0 : index
    %317 = vector.load %arg24[%c0_110, %c0_111] : memref<8x128xf32, #tpu.memory_space<vmem>>, vector<8x128xf32>
    tpu.vector_store %arg24[%c0_110, %c0_111], %316 {strides = array<i32>} : memref<8x128xf32, #tpu.memory_space<vmem>>, vector<8x128xf32>,
    %c0_112 = arith.constant 0 : index
    %c0_113 = arith.constant 0 : index
    %318 = vector.load %arg3[%c0_112, %c0_113] : memref<8x8xf32, #tpu.memory_space<vmem>>, vector<8x8xf32>
    %c0_114 = arith.constant 0 : index
    %c0_115 = arith.constant 0 : index
    %319 = vector.load %arg15[%c0_114, %c0_115] : memref<8x16xf32, #tpu.memory_space<vmem>>, vector<8x16xf32>
    %cst_116 = arith.constant dense<0.000000e+00> : vector<8x16xf32>
    %320 = tpu.matmul %318, %319, %cst_116 {dimension_numbers = #tpu.dot_dimension_numbers<[1], [0], [0], [1], [0, 0, 1, 1], [], []>} : vector<8x8xf32>, vector<8x16xf32>, vector<8x16xf32> -> vector<8x16xf32>
    %c0_117 = arith.constant 0 : index
    %c0_118 = arith.constant 0 : index
    %321 = vector.load %arg16[%c0_117, %c0_118] : memref<1x16xf32, #tpu.memory_space<vmem>>, vector<1x16xf32>
    %322 = vector.broadcast %321 : vector<1x16xf32> to vector<8x16xf32>
    %323 = arith.addf %320, %322 : vector<8x16xf32>
    %c0_119 = arith.constant 0 : index
    %c0_120 = arith.constant 0 : index
    %324 = vector.load %arg17[%c0_119, %c0_120] : memref<1x16xf32, #tpu.memory_space<vmem>>, vector<1x16xf32>
    %c0_121 = arith.constant 0 : index
    %c0_122 = arith.constant 0 : index
    %325 = vector.load %arg18[%c0_121, %c0_122] : memref<1x16xf32, #tpu.memory_space<vmem>>, vector<1x16xf32>
    %cst_123 = arith.constant dense<0.000000e+00> : vector<8xf32>
    %326 = vector.multi_reduction <add>, %323, %cst_123 [1] : vector<8x16xf32> to vector<8xf32>
    %327 = vector.shape_cast %326 : vector<8xf32> to vector<8x1xf32>
    %cst_124 = arith.constant 1.600000e+01 : f32
    %328 = vector.broadcast %cst_124 : f32 to vector<8x1xf32>
    %329 = arith.divf %327, %328 : vector<8x1xf32>
    %330 = vector.broadcast %329 : vector<8x1xf32> to vector<8x16xf32>
    %331 = arith.subf %323, %330 : vector<8x16xf32>
    %332 = arith.mulf %331, %331 : vector<8x16xf32>
    %cst_125 = arith.constant dense<0.000000e+00> : vector<8xf32>
    %333 = vector.multi_reduction <add>, %332, %cst_125 [1] : vector<8x16xf32> to vector<8xf32>
    %334 = vector.shape_cast %333 : vector<8xf32> to vector<8x1xf32>
    %cst_126 = arith.constant 1.600000e+01 : f32
    %335 = vector.broadcast %cst_126 : f32 to vector<8x1xf32>
    %336 = arith.divf %334, %335 : vector<8x1xf32>
    %337 = vector.broadcast %329 : vector<8x1xf32> to vector<8x16xf32>
    %338 = arith.subf %323, %337 : vector<8x16xf32>
    %cst_127 = arith.constant 9.99999974E-6 : f32
    %339 = vector.broadcast %cst_127 : f32 to vector<8x1xf32>
    %340 = arith.addf %336, %339 : vector<8x1xf32>
    %341 = math.rsqrt %340 : vector<8x1xf32>
    %342 = vector.broadcast %341 : vector<8x1xf32> to vector<8x16xf32>
    %343 = arith.mulf %338, %342 : vector<8x16xf32>
    %344 = vector.broadcast %324 : vector<1x16xf32> to vector<8x16xf32>
    %345 = arith.mulf %343, %344 : vector<8x16xf32>
    %346 = vector.broadcast %325 : vector<1x16xf32> to vector<8x16xf32>
    %347 = arith.addf %345, %346 : vector<8x16xf32>
    %348 = math.tanh %347 : vector<8x16xf32>
    %c0_128 = arith.constant 0 : index
    %c0_129 = arith.constant 0 : index
    %349 = vector.load %arg19[%c0_128, %c0_129] : memref<16x128xf32, #tpu.memory_space<vmem>>, vector<16x128xf32>
    %cst_130 = arith.constant dense<0.000000e+00> : vector<8x128xf32>
    %350 = tpu.matmul %348, %349, %cst_130 {dimension_numbers = #tpu.dot_dimension_numbers<[1], [0], [0], [1], [0, 0, 1, 1], [], []>} : vector<8x16xf32>, vector<16x128xf32>, vector<8x128xf32> -> vector<8x128xf32>
    %c0_131 = arith.constant 0 : index
    %c0_132 = arith.constant 0 : index
    %351 = vector.load %arg20[%c0_131, %c0_132] : memref<1x128xf32, #tpu.memory_space<vmem>>, vector<1x128xf32>
    %352 = vector.broadcast %351 : vector<1x128xf32> to vector<8x128xf32>
    %353 = arith.addf %350, %352 : vector<8x128xf32>
    %354 = arith.negf %353 : vector<8x128xf32>
    %355 = math.exp %354 : vector<8x128xf32>
    %cst_133 = arith.constant 1.000000e+00 : f32
    %356 = vector.broadcast %cst_133 : f32 to vector<8x128xf32>
    %357 = arith.addf %356, %355 : vector<8x128xf32>
    %358 = arith.divf %356, %357 : vector<8x128xf32>
    %c0_134 = arith.constant 0 : index
    %c0_135 = arith.constant 0 : index
    %359 = vector.load %arg25[%c0_134, %c0_135] : memref<8x128xf32, #tpu.memory_space<vmem>>, vector<8x128xf32>
    tpu.vector_store %arg25[%c0_134, %c0_135], %358 {strides = array<i32>} : memref<8x128xf32, #tpu.memory_space<vmem>>, vector<8x128xf32>,
    %c0_136 = arith.constant 0 : index
    %c0_137 = arith.constant 0 : index
    %360 = vector.load %arg2[%c0_136, %c0_137] : memref<1x8xi32, #tpu.memory_space<vmem>>, vector<1x8xi32>
    %361 = tpu.iota {dimensions = array<i32: 0>} : vector<8x8xi32>
    %362 = vector.broadcast %360 : vector<1x8xi32> to vector<8x8xi32>
    %363 = arith.cmpi eq, %361, %362 : vector<8x8xi32>
    %364 = arith.extui %363 : vector<8x8xi1> to vector<8x8xi32>
    %365 = arith.sitofp %364 : vector<8x8xi32> to vector<8x8xf32>
    %366 = tpu.iota {dimensions = array<i32: 1>} : vector<8x128xi32>
    %c0_i32_138 = arith.constant 0 : i32
    %367 = vector.broadcast %c0_i32_138 : i32 to vector<8x128xi32>
    %368 = arith.cmpi eq, %366, %367 : vector<8x128xi32>
    %c1_i32_139 = arith.constant 1 : i32
    %369 = vector.broadcast %c1_i32_139 : i32 to vector<8x128xi32>
    %370 = arith.cmpi eq, %366, %369 : vector<8x128xi32>
    %cst_140 = arith.constant 1.000000e+00 : f32
    %cst_141 = arith.constant 0.000000e+00 : f32
    %371 = vector.broadcast %cst_140 : f32 to vector<8x128xf32>
    %372 = vector.broadcast %cst_141 : f32 to vector<8x128xf32>
    %373 = arith.select %370, %371, %372 : vector<8x128xi1>, vector<8x128xf32>
    %374 = arith.select %368, %358, %373 : vector<8x128xi1>, vector<8x128xf32>
    %cst_142 = arith.constant dense<0.000000e+00> : vector<8x128xf32>
    %375 = tpu.matmul %365, %374, %cst_142 {dimension_numbers = #tpu.dot_dimension_numbers<[1], [0], [0], [1], [0, 0, 1, 1], [], []>} : vector<8x8xf32>, vector<8x128xf32>, vector<8x128xf32> -> vector<8x128xf32>
    %376 = vector.extract_strided_slice %375 {offsets = [0, 0], sizes = [8, 1], strides = [1, 1]} : vector<8x128xf32> to vector<8x1xf32>
    %377 = vector.extract_strided_slice %375 {offsets = [0, 1], sizes = [8, 1], strides = [1, 1]} : vector<8x128xf32> to vector<8x1xf32>
    %cst_143 = arith.constant 1.000000e+00 : f32
    %378 = vector.broadcast %cst_143 : f32 to vector<8x1xf32>
    %379 = arith.maximumf %377, %378 : vector<8x1xf32>
    %380 = arith.divf %376, %379 : vector<8x1xf32>
    %cst_144 = arith.constant 1.000000e+00 : f32
    %381 = vector.broadcast %cst_144 : f32 to vector<8x1xf32>
    %382 = arith.mulf %381, %380 : vector<8x1xf32>
    %c0_145 = arith.constant 0 : index
    %c0_146 = arith.constant 0 : index
    %383 = memref.load %arg22[%c0_145, %c0_146] : memref<1x1xf32, #tpu.memory_space<smem>>
    %c0_147 = arith.constant 0 : index
    %c0_148 = arith.constant 0 : index
    %384 = memref.load %arg23[%c0_147, %c0_148] : memref<1x1xf32, #tpu.memory_space<smem>>
    %c0_149 = arith.constant 0 : index
    %c0_150 = arith.constant 0 : index
    %385 = vector.load %arg21[%c0_149, %c0_150] : memref<128x1xf32, #tpu.memory_space<vmem>>, vector<128x1xf32>
    %cst_151 = arith.constant dense<0.000000e+00> : vector<8x1xf32>
    %386 = tpu.matmul %316, %385, %cst_151 {dimension_numbers = #tpu.dot_dimension_numbers<[1], [0], [0], [1], [0, 0, 1, 1], [], []>} : vector<8x128xf32>, vector<128x1xf32>, vector<8x1xf32> -> vector<8x1xf32>
    %387 = vector.broadcast %383 : f32 to vector<8x1xf32>
    %388 = arith.mulf %382, %387 : vector<8x1xf32>
    %389 = arith.addf %386, %388 : vector<8x1xf32>
    %390 = vector.broadcast %384 : f32 to vector<8x1xf32>
    %391 = arith.addf %389, %390 : vector<8x1xf32>
    %392 = arith.negf %391 : vector<8x1xf32>
    %393 = math.exp %392 : vector<8x1xf32>
    %cst_152 = arith.constant 1.000000e+00 : f32
    %394 = vector.broadcast %cst_152 : f32 to vector<8x1xf32>
    %395 = arith.addf %394, %393 : vector<8x1xf32>
    %396 = arith.divf %394, %395 : vector<8x1xf32>
    %397 = vector.shape_cast %396 : vector<8x1xf32> to vector<8x1xf32>
    %398 = vector.broadcast %397 : vector<8x1xf32> to vector<8x128xf32>
    %c0_153 = arith.constant 0 : index
    %c0_154 = arith.constant 0 : index
    %399 = vector.load %arg26[%c0_153, %c0_154] : memref<8x128xf32, #tpu.memory_space<vmem>>, vector<8x128xf32>
    tpu.vector_store %arg26[%c0_153, %c0_154], %398 {strides = array<i32>} : memref<8x128xf32, #tpu.memory_space<vmem>>, vector<8x128xf32>,
    return
  }
}

</mosaic_0001>

<llo_original>
// kernel: tpu_custom_call.1
$region0: #{tpu_custom_call.1}
  #allocation0 [shape = 'u32[]', space=smem, size = 0x4, offset = 0x4, fixed_abs, tag = 'smem constant byte address 0x4 - core index']
  #allocation1 [shape = 'u32[72,128]{1,0:T(1,128)}', space=vmem, size = 0x9000, scoped, tag = 'internal scratch']
  #allocation2 [shape = 'f32[64,128]{1,0:T(8,128)}', space=vmem, size = 0x8000, scoped, tag = 'scratch operand']
  #allocation3 [shape = 'f32[1,1]{1,0:T(1,128)S(6)}', space=smem, size = 0x200, scoped, tag = 'scoped memory for tpu_custom_call.1']
  #allocation4 [shape = 'f32[1,1]{1,0:T(1,128)S(6)}', space=smem, size = 0x200, scoped, tag = 'scoped memory for tpu_custom_call.1']
  %s0 = inlined_call_operand.vmem [shape: f32[64,16], index: 0, kind: input, shape index: {}]
  %s1 = inlined_call_operand.vmem [shape: s32[8,1], index: 1, kind: input, shape index: {}]
  %s2 = inlined_call_operand.vmem [shape: s32[1,8], index: 2, kind: input, shape index: {}]
  %s3 = inlined_call_operand.vmem [shape: f32[8,8], index: 3, kind: input, shape index: {}]
  %s4 = inlined_call_operand.vmem [shape: f32[16,32], index: 4, kind: input, shape index: {}]
  %s5 = inlined_call_operand.vmem [shape: f32[1,32], index: 5, kind: input, shape index: {}]
  %s6 = inlined_call_operand.hbm [shape: f32[1,32], index: 6, kind: input, shape index: {}]
  %s7 = inlined_call_operand.hbm [shape: f32[1,32], index: 7, kind: input, shape index: {}]
  %s8 = inlined_call_operand.vmem [shape: f32[32,128], index: 8, kind: input, shape index: {}]
  %s9 = inlined_call_operand.vmem [shape: f32[128,128], index: 9, kind: input, shape index: {}]
  %s10 = inlined_call_operand.hbm [shape: f32[1,128], index: 10, kind: input, shape index: {}]
  %s11 = inlined_call_operand.hbm [shape: f32[1,32], index: 11, kind: input, shape index: {}]
  %s12 = inlined_call_operand.hbm [shape: f32[1,32], index: 12, kind: input, shape index: {}]
  %s13 = inlined_call_operand.vmem [shape: f32[32,128], index: 13, kind: input, shape index: {}]
  %s14 = inlined_call_operand.hbm [shape: f32[1,128], index: 14, kind: input, shape index: {}]
  %s15 = inlined_call_operand.hbm [shape: f32[8,16], index: 15, kind: input, shape index: {}]
  %s16 = inlined_call_operand.hbm [shape: f32[1,16], index: 16, kind: input, shape index: {}]
  %s17 = inlined_call_operand.hbm [shape: f32[1,16], index: 17, kind: input, shape index: {}]
  %s18 = inlined_call_operand.vmem [shape: f32[1,16], index: 18, kind: input, shape index: {}]
  %s19 = inlined_call_operand.vmem [shape: f32[16,128], index: 19, kind: input, shape index: {}]
  %s20 = inlined_call_operand.vmem [shape: f32[1,128], index: 20, kind: input, shape index: {}]
  %s21 = inlined_call_operand.vmem [shape: f32[128,1], index: 21, kind: input, shape index: {}]
  %s22 = inlined_call_operand.<no memory space> [shape: f32[1,1], index: 22, kind: input, shape index: {}]
  %s23 = inlined_call_operand.<no memory space> [shape: f32[1,1], index: 23, kind: input, shape index: {}]
  %s24 = inlined_call_operand.hbm [shape: f32[8,128], index: 24, kind: output, shape index: {0}]
  %s25 = inlined_call_operand.hbm [shape: f32[8,128], index: 25, kind: output, shape index: {1}]
  %s26 = inlined_call_operand.hbm [shape: f32[8,128], index: 26, kind: output, shape index: {2}]
  %27 = xla_tuple %s24, %s25, %s26
  %s28 = sld [smem:[#allocation0]]
  $region158: #{tpu_custom_call.1} parent=0
    _
  %s30 = ssub.s32 1, %s28
  %s31 = scalar_select 0, %s30, %s28
  %32 = sst [smem:[#allocation3]] %s22
  %33 = sst [smem:[#allocation4]] %s23
  $region1: #{tpu_custom_call.1} parent=0
    #allocation5 [shape = 'u8[512]{0}', space=vmem, size = 0x400, scoped, tag = 'input window, operand 6, single buffered']
    #allocation6 [shape = 's32[1]{0}', space=sflag, size = 0x4, scoped, tag = 'scoped memory for tpu_custom_call.1']
    #allocation7 [shape = 's32[1]{0}', space=sflag, size = 0x4, scoped, tag = 'scoped memory for tpu_custom_call.1']
    #allocation8 [shape = 'u8[512]{0}', space=vmem, size = 0x400, scoped, tag = 'input window, operand 7, single buffered']
    #allocation9 [shape = 's32[1]{0}', space=sflag, size = 0x4, scoped, tag = 'scoped memory for tpu_custom_call.1']
    #allocation10 [shape = 'u8[512]{0}', space=vmem, size = 0x400, scoped, tag = 'input window, operand 10, single buffered']
    #allocation11 [shape = 'u8[512]{0}', space=vmem, size = 0x400, scoped, tag = 'input window, operand 11, single buffered']
    #allocation12 [shape = 's32[1]{0}', space=sflag, size = 0x4, scoped, tag = 'scoped memory for tpu_custom_call.1']
    #allocation13 [shape = 'u8[512]{0}', space=vmem, size = 0x400, scoped, tag = 'input window, operand 12, single buffered']
    #allocation14 [shape = 'u8[512]{0}', space=vmem, size = 0x400, scoped, tag = 'input window, operand 14, single buffered']
    #allocation15 [shape = 's32[1]{0}', space=sflag, size = 0x4, scoped, tag = 'scoped memory for tpu_custom_call.1']
    #allocation16 [shape = 'u8[4096]{0}', space=vmem, size = 0x1000, scoped, tag = 'input window, operand 15, single buffered']
    #allocation17 [shape = 'u8[512]{0}', space=vmem, size = 0x400, scoped, tag = 'input window, operand 16, single buffered']
    #allocation18 [shape = 's32[1]{0}', space=sflag, size = 0x4, scoped, tag = 'scoped memory for tpu_custom_call.1']
    #allocation19 [shape = 'u8[512]{0}', space=vmem, size = 0x400, scoped, tag = 'input window, operand 17, single buffered']
    #allocation20 [shape = 'u8[4096]{0}', space=vmem, size = 0x1000, scoped, tag = 'output window, operand 0, single buffered']
    #allocation21 [shape = 'u8[4096]{0}', space=vmem, size = 0x1000, scoped, tag = 'output window, operand 1, single buffered']
    #allocation22 [shape = 's32[1]{0}', space=sflag, size = 0x4, scoped, tag = 'scoped memory for tpu_custom_call.1']
    #allocation23 [shape = 'u8[4096]{0}', space=vmem, size = 0x1000, scoped, tag = 'output window, operand 2, single buffered']
    %34 = vsyncpa [#allocation6], 0
    %35 = vsyncpa [#allocation9], 0
    %36 = vsyncpa [#allocation12], 0
    %37 = vsyncpa [#allocation15], 0
    %38 = vsyncpa [#allocation18], 0
    %39 = vsyncpa [#allocation7], 0
    %40 = vsyncpa [#allocation22], 0
    // Predicated region
    $region2: #{tpu_custom_call.1} parent=1 // pred_check
      _
    $region3: #{tpu_custom_call.1} parent=1 // pred_check_branch
      %42 = sbr.rel (0) target = $region5
    $region4: #{tpu_custom_call.1} parent=1 // pred_region
      _
    $region5: #{tpu_custom_call.1} parent=1 // pred_fallthru
      _
    // Predicated region
    $region6: #{tpu_custom_call.1} parent=1 // pred_check
      _
    $region7: #{tpu_custom_call.1} parent=1 // pred_check_branch
      %44 = sbr.rel (0) target = $region9
    $region8: #{tpu_custom_call.1} parent=1 // pred_region
      _
    $region9: #{tpu_custom_call.1} parent=1 // pred_fallthru
      _
    // Predicated region
    $region10: #{tpu_custom_call.1} parent=1 // pred_check
      _
    $region11: #{tpu_custom_call.1} parent=1 // pred_check_branch
      %46 = sbr.rel (0) target = $region13
    $region12: #{tpu_custom_call.1} parent=1 // pred_region
      _
    $region13: #{tpu_custom_call.1} parent=1 // pred_fallthru
      _
    // Predicated region
    $region14: #{tpu_custom_call.1} parent=1 // pred_check
      _
    $region15: #{tpu_custom_call.1} parent=1 // pred_check_branch
      %48 = sbr.rel (0) target = $region17
    $region16: #{tpu_custom_call.1} parent=1 // pred_region
      _
    $region17: #{tpu_custom_call.1} parent=1 // pred_fallthru
      _
    // Predicated region
    $region18: #{tpu_custom_call.1} parent=1 // pred_check
      _
    $region19: #{tpu_custom_call.1} parent=1 // pred_check_branch
      %50 = sbr.rel (0) target = $region21
    $region20: #{tpu_custom_call.1} parent=1 // pred_region
      _
    $region21: #{tpu_custom_call.1} parent=1 // pred_fallthru
      _
    // Predicated region
    $region22: #{tpu_custom_call.1} parent=1 // pred_check
      _
    $region23: #{tpu_custom_call.1} parent=1 // pred_check_branch
      %52 = sbr.rel (0) target = $region25
    $region24: #{tpu_custom_call.1} parent=1 // pred_region
      _
    $region25: #{tpu_custom_call.1} parent=1 // pred_fallthru
      _
    // Predicated region
    $region26: #{tpu_custom_call.1} parent=1 // pred_check
      _
    $region27: #{tpu_custom_call.1} parent=1 // pred_check_branch
      %54 = sbr.rel (0) target = $region29
    $region28: #{tpu_custom_call.1} parent=1 // pred_region
      %56 = vsyncadd [#allocation6], 0
      %s58 = sshll.u32 %s6, 4
      %s59 = int_to_ptr.hbm [resolvable:$true] %s58
      %s60 = sshll.u32 [#allocation5], 4
      %s61 = int_to_ptr.vmem [resolvable:$true] %s60
      %63 = dma.hbm_to_vmem [thread:$0]  %s59, 16, %s61, [#allocation6]
    $region29: #{tpu_custom_call.1} parent=1 // pred_fallthru
      _
    // Predicated region
    $region30: #{tpu_custom_call.1} parent=1 // pred_check
      _
    $region31: #{tpu_custom_call.1} parent=1 // pred_check_branch
      %65 = sbr.rel (0) target = $region33
    $region32: #{tpu_custom_call.1} parent=1 // pred_region
      %67 = vsyncadd [#allocation9], 0
      %s69 = sshll.u32 %s7, 4
      %s70 = int_to_ptr.hbm [resolvable:$true] %s69
      %s71 = sshll.u32 [#allocation8], 4
      %s72 = int_to_ptr.vmem [resolvable:$true] %s71
      %74 = dma.hbm_to_vmem [thread:$0]  %s70, 16, %s72, [#allocation9]
    $region33: #{tpu_custom_call.1} parent=1 // pred_fallthru
      _
    // Predicated region
    $region34: #{tpu_custom_call.1} parent=1 // pred_check
      _
    $region35: #{tpu_custom_call.1} parent=1 // pred_check_branch
      %76 = sbr.rel (0) target = $region37
    $region36: #{tpu_custom_call.1} parent=1 // pred_region
      _
    $region37: #{tpu_custom_call.1} parent=1 // pred_fallthru
      _
    // Predicated region
    $region38: #{tpu_custom_call.1} parent=1 // pred_check
      _
    $region39: #{tpu_custom_call.1} parent=1 // pred_check_branch
      %78 = sbr.rel (0) target = $region41
    $region40: #{tpu_custom_call.1} parent=1 // pred_region
      _
    $region41: #{tpu_custom_call.1} parent=1 // pred_fallthru
      _
    // Predicated region
    $region42: #{tpu_custom_call.1} parent=1 // pred_check
      _
    $region43: #{tpu_custom_call.1} parent=1 // pred_check_branch
      %80 = sbr.rel (0) target = $region45
    $region44: #{tpu_custom_call.1} parent=1 // pred_region
      %82 = vsyncadd [#allocation9], 0
      %s84 = sshll.u32 %s10, 4
      %s85 = int_to_ptr.hbm [resolvable:$true] %s84
      %s86 = sshll.u32 [#allocation10], 4
      %s87 = int_to_ptr.vmem [resolvable:$true] %s86
      %89 = dma.hbm_to_vmem [thread:$0]  %s85, 16, %s87, [#allocation9]
    $region45: #{tpu_custom_call.1} parent=1 // pred_fallthru
      _
    // Predicated region
    $region46: #{tpu_custom_call.1} parent=1 // pred_check
      _
    $region47: #{tpu_custom_call.1} parent=1 // pred_check_branch
      %91 = sbr.rel (0) target = $region49
    $region48: #{tpu_custom_call.1} parent=1 // pred_region
      %93 = vsyncadd [#allocation12], 0
      %s95 = sshll.u32 %s11, 4
      %s96 = int_to_ptr.hbm [resolvable:$true] %s95
      %s97 = sshll.u32 [#allocation11], 4
      %s98 = int_to_ptr.vmem [resolvable:$true] %s97
      %100 = dma.hbm_to_vmem [thread:$0]  %s96, 16, %s98, [#allocation12]
    $region49: #{tpu_custom_call.1} parent=1 // pred_fallthru
      _
    // Predicated region
    $region50: #{tpu_custom_call.1} parent=1 // pred_check
      _
    $region51: #{tpu_custom_call.1} parent=1 // pred_check_branch
      %102 = sbr.rel (0) target = $region53
    $region52: #{tpu_custom_call.1} parent=1 // pred_region
      %104 = vsyncadd [#allocation12], 0
      %s106 = sshll.u32 %s12, 4
      %s107 = int_to_ptr.hbm [resolvable:$true] %s106
      %s108 = sshll.u32 [#allocation13], 4
      %s109 = int_to_ptr.vmem [resolvable:$true] %s108
      %111 = dma.hbm_to_vmem [thread:$0]  %s107, 16, %s109, [#allocation12]
    $region53: #{tpu_custom_call.1} parent=1 // pred_fallthru
      _
    // Predicated region
    $region54: #{tpu_custom_call.1} parent=1 // pred_check
      _
    $region55: #{tpu_custom_call.1} parent=1 // pred_check_branch
      %113 = sbr.rel (0) target = $region57
    $region56: #{tpu_custom_call.1} parent=1 // pred_region
      _
    $region57: #{tpu_custom_call.1} parent=1 // pred_fallthru
      _
    // Predicated region
    $region58: #{tpu_custom_call.1} parent=1 // pred_check
      _
    $region59: #{tpu_custom_call.1} parent=1 // pred_check_branch
      %115 = sbr.rel (0) target = $region61
    $region60: #{tpu_custom_call.1} parent=1 // pred_region
      %117 = vsyncadd [#allocation15], 0
      %s119 = sshll.u32 %s14, 4
      %s120 = int_to_ptr.hbm [resolvable:$true] %s119
      %s121 = sshll.u32 [#allocation14], 4
      %s122 = int_to_ptr.vmem [resolvable:$true] %s121
      %124 = dma.hbm_to_vmem [thread:$0]  %s120, 16, %s122, [#allocation15]
    $region61: #{tpu_custom_call.1} parent=1 // pred_fallthru
      _
    // Predicated region
    $region62: #{tpu_custom_call.1} parent=1 // pred_check
      _
    $region63: #{tpu_custom_call.1} parent=1 // pred_check_branch
      %126 = sbr.rel (0) target = $region65
    $region64: #{tpu_custom_call.1} parent=1 // pred_region
      %128 = vsyncadd [#allocation15], 0
      %s130 = sshll.u32 %s15, 4
      %s131 = int_to_ptr.hbm [resolvable:$true] %s130
      %s132 = sshll.u32 [#allocation16], 4
      %s133 = int_to_ptr.vmem [resolvable:$true] %s132
      %135 = dma.hbm_to_vmem [thread:$0]  %s131, 128, %s133, [#allocation15]
    $region65: #{tpu_custom_call.1} parent=1 // pred_fallthru
      _
    // Predicated region
    $region66: #{tpu_custom_call.1} parent=1 // pred_check
      _
    $region67: #{tpu_custom_call.1} parent=1 // pred_check_branch
      %137 = sbr.rel (0) target = $region69
    $region68: #{tpu_custom_call.1} parent=1 // pred_region
      %139 = vsyncadd [#allocation18], 0
      %s141 = sshll.u32 %s16, 4
      %s142 = int_to_ptr.hbm [resolvable:$true] %s141
      %s143 = sshll.u32 [#allocation17], 4
      %s144 = int_to_ptr.vmem [resolvable:$true] %s143
      %146 = dma.hbm_to_vmem [thread:$0]  %s142, 16, %s144, [#allocation18]
    $region69: #{tpu_custom_call.1} parent=1 // pred_fallthru
      _
    // Predicated region
    $region70: #{tpu_custom_call.1} parent=1 // pred_check
      _
    $region71: #{tpu_custom_call.1} parent=1 // pred_check_branch
      %148 = sbr.rel (0) target = $region73
    $region72: #{tpu_custom_call.1} parent=1 // pred_region
      %150 = vsyncadd [#allocation18], 0
      %s152 = sshll.u32 %s17, 4
      %s153 = int_to_ptr.hbm [resolvable:$true] %s152
      %s154 = sshll.u32 [#allocation19], 4
      %s155 = int_to_ptr.vmem [resolvable:$true] %s154
      %157 = dma.hbm_to_vmem [thread:$0]  %s153, 16, %s155, [#allocation18]
    $region73: #{tpu_custom_call.1} parent=1 // pred_fallthru
      _
    // Predicated region
    $region74: #{tpu_custom_call.1} parent=1 // pred_check
      _
    $region75: #{tpu_custom_call.1} parent=1 // pred_check_branch
      %159 = sbr.rel (0) target = $region77
    $region76: #{tpu_custom_call.1} parent=1 // pred_region
      _
    $region77: #{tpu_custom_call.1} parent=1 // pred_fallthru
      _
    // Predicated region
    $region78: #{tpu_custom_call.1} parent=1 // pred_check
      _
    $region79: #{tpu_custom_call.1} parent=1 // pred_check_branch
      %161 = sbr.rel (0) target = $region81
    $region80: #{tpu_custom_call.1} parent=1 // pred_region
      _
    $region81: #{tpu_custom_call.1} parent=1 // pred_fallthru
      _
    // Predicated region
    $region82: #{tpu_custom_call.1} parent=1 // pred_check
      _
    $region83: #{tpu_custom_call.1} parent=1 // pred_check_branch
      %163 = sbr.rel (0) target = $region85
    $region84: #{tpu_custom_call.1} parent=1 // pred_region
      _
    $region85: #{tpu_custom_call.1} parent=1 // pred_fallthru
      _
    // Predicated region
    $region86: #{tpu_custom_call.1} parent=1 // pred_check
      _
    $region87: #{tpu_custom_call.1} parent=1 // pred_check_branch
      %165 = sbr.rel (0) target = $region89
    $region88: #{tpu_custom_call.1} parent=1 // pred_region
      _
    $region89: #{tpu_custom_call.1} parent=1 // pred_fallthru
      _
    // Predicated region
    $region90: #{tpu_custom_call.1} parent=1 // pred_check
      _
    $region91: #{tpu_custom_call.1} parent=1 // pred_check_branch
      %167 = sbr.rel (0) target = $region93
    $region92: #{tpu_custom_call.1} parent=1 // pred_region
      _
    $region93: #{tpu_custom_call.1} parent=1 // pred_fallthru
      _
    // Predicated region
    $region94: #{tpu_custom_call.1} parent=1 // pred_check
      _
    $region95: #{tpu_custom_call.1} parent=1 // pred_check_branch
      %169 = sbr.rel (0) target = $region97
    $region96: #{tpu_custom_call.1} parent=1 // pred_region
      _
    $region97: #{tpu_custom_call.1} parent=1 // pred_fallthru
      _
    // Predicated region
    $region98: #{tpu_custom_call.1} parent=1 // pred_check
      _
    $region99: #{tpu_custom_call.1} parent=1 // pred_check_branch
      %171 = sbr.rel (0) target = $region101
    $region100: #{tpu_custom_call.1} parent=1 // pred_region
      %173 = dma.done [#allocation6], 16
    $region101: #{tpu_custom_call.1} parent=1 // pred_fallthru
      _
    // Predicated region
    $region102: #{tpu_custom_call.1} parent=1 // pred_check
      _
    $region103: #{tpu_custom_call.1} parent=1 // pred_check_branch
      %175 = sbr.rel (0) target = $region105
    $region104: #{tpu_custom_call.1} parent=1 // pred_region
      %177 = dma.done [#allocation9], 16
    $region105: #{tpu_custom_call.1} parent=1 // pred_fallthru
      _
    // Predicated region
    $region106: #{tpu_custom_call.1} parent=1 // pred_check
      _
    $region107: #{tpu_custom_call.1} parent=1 // pred_check_branch
      %179 = sbr.rel (0) target = $region109
    $region108: #{tpu_custom_call.1} parent=1 // pred_region
      %181 = dma.done [#allocation9], 16
    $region109: #{tpu_custom_call.1} parent=1 // pred_fallthru
      _
    // Predicated region
    $region110: #{tpu_custom_call.1} parent=1 // pred_check
      _
    $region111: #{tpu_custom_call.1} parent=1 // pred_check_branch
      %183 = sbr.rel (0) target = $region113
    $region112: #{tpu_custom_call.1} parent=1 // pred_region
      %185 = dma.done [#allocation12], 16
    $region113: #{tpu_custom_call.1} parent=1 // pred_fallthru
      _
    // Predicated region
    $region114: #{tpu_custom_call.1} parent=1 // pred_check
      _
    $region115: #{tpu_custom_call.1} parent=1 // pred_check_branch
      %187 = sbr.rel (0) target = $region117
    $region116: #{tpu_custom_call.1} parent=1 // pred_region
      %189 = dma.done [#allocation12], 16
    $region117: #{tpu_custom_call.1} parent=1 // pred_fallthru
      _
    // Predicated region
    $region118: #{tpu_custom_call.1} parent=1 // pred_check
      _
    $region119: #{tpu_custom_call.1} parent=1 // pred_check_branch
      %191 = sbr.rel (0) target = $region121
    $region120: #{tpu_custom_call.1} parent=1 // pred_region
      %193 = dma.done [#allocation15], 16
    $region121: #{tpu_custom_call.1} parent=1 // pred_fallthru
      _
    // Predicated region
    $region122: #{tpu_custom_call.1} parent=1 // pred_check
      _
    $region123: #{tpu_custom_call.1} parent=1 // pred_check_branch
      %195 = sbr.rel (0) target = $region125
    $region124: #{tpu_custom_call.1} parent=1 // pred_region
      %197 = dma.done [#allocation15], 128
    $region125: #{tpu_custom_call.1} parent=1 // pred_fallthru
      _
    // Predicated region
    $region126: #{tpu_custom_call.1} parent=1 // pred_check
      _
    $region127: #{tpu_custom_call.1} parent=1 // pred_check_branch
      %199 = sbr.rel (0) target = $region129
    $region128: #{tpu_custom_call.1} parent=1 // pred_region
      %201 = dma.done [#allocation18], 16
    $region129: #{tpu_custom_call.1} parent=1 // pred_fallthru
      _
    // Predicated region
    $region130: #{tpu_custom_call.1} parent=1 // pred_check
      _
    $region131: #{tpu_custom_call.1} parent=1 // pred_check_branch
      %203 = sbr.rel (0) target = $region133
    $region132: #{tpu_custom_call.1} parent=1 // pred_region
      %205 = dma.done [#allocation18], 16
    $region133: #{tpu_custom_call.1} parent=1 // pred_fallthru
      _
    %v206 = vld [vmem:[%s0] sm:$0xff]
    %v207 = vld [vmem:[%s0 + $0x8] sm:$0xff]
    %v208 = vld [vmem:[%s0 + $0x10] sm:$0xff]
    %v209 = vld [vmem:[%s0 + $0x18] sm:$0xff]
    %v210 = vld [vmem:[%s0 + $0x20] sm:$0xff]
    %v211 = vld [vmem:[%s0 + $0x28] sm:$0xff]
    %v212 = vld [vmem:[%s0 + $0x30] sm:$0xff]
    %v213 = vld [vmem:[%s0 + $0x38] sm:$0xff]
    %v214 = vld [vmem:[%s4] sm:$0xff]
    %v215 = vld [vmem:[%s4 + $0x8] sm:$0xff]
    %v216 = vld [vmem:[%s5] sm:$0x1]
    %v218 = vperm.slane %v216, 0
    %vm220 = vcmask 130048
    %v222 = vsel %vm220, %v206, 0
    %v225 = vsel %vm220, %v207, 0
    %v228 = vsel %vm220, %v208, 0
    %v231 = vsel %vm220, %v209, 0
    %v234 = vsel %vm220, %v210, 0
    %v237 = vsel %vm220, %v211, 0
    %v240 = vsel %vm220, %v212, 0
    %v243 = vsel %vm220, %v213, 0
    %245 = vmatpush.msra.mxu0 0.0
    %246 = vmatpush.msra.mxu0 0.0
    %247 = vmatpush.msra.mxu0 0.0
    %248 = vmatpush.msra.mxu0 0.0
    %249 = vmatpush.msra.mxu0 0.0
    %250 = vmatpush.msra.mxu0 0.0
    %251 = vmatpush.msra.mxu0 0.0
    %252 = vmatpush.msra.mxu0 0.0
    %253 = vmatpush.msra.mxu0 0.0
    %254 = vmatpush.msra.mxu0 0.0
    %255 = vmatpush.msra.mxu0 0.0
    %256 = vmatpush.msra.mxu0 0.0
    %257 = vmatpush.msra.mxu0 0.0
    %258 = vmatpush.msra.mxu0 0.0
    %259 = vmatpush.msra.mxu0 %v215
    %260 = vmatpush.msra.mxu0 %v214
    %261 = vmatmul.f32.gmra.mxu0 %v222
    %v262 = vpop.f32.mrf.mxu0
    %v263 = vadd.f32 %v218, %v262
    %264 = vmatmul.f32.gmra.mxu0 %v225
    %v265 = vpop.f32.mrf.mxu0
    %v266 = vadd.f32 %v218, %v265
    %267 = vmatmul.f32.gmra.mxu0 %v228
    %v268 = vpop.f32.mrf.mxu0
    %v269 = vadd.f32 %v218, %v268
    %270 = vmatmul.f32.gmra.mxu0 %v231
    %v271 = vpop.f32.mrf.mxu0
    %v272 = vadd.f32 %v218, %v271
    %273 = vmatmul.f32.gmra.mxu0 %v234
    %v274 = vpop.f32.mrf.mxu0
    %v275 = vadd.f32 %v218, %v274
    %276 = vmatmul.f32.gmra.mxu0 %v237
    %v277 = vpop.f32.mrf.mxu0
    %v278 = vadd.f32 %v218, %v277
    %279 = vmatmul.f32.gmra.mxu0 %v240
    %v280 = vpop.f32.mrf.mxu0
    %v281 = vadd.f32 %v218, %v280
    %282 = vmatmul.f32.gmra.mxu0 %v243
    %v283 = vpop.f32.mrf.mxu0
    %v284 = vadd.f32 %v218, %v283
    %285 = vdwg.mxu0
    %v286 = vld [vmem:[#allocation5] sm:$0x1]
    %v287 = vld [vmem:[#allocation8] sm:$0x1]
    %vm288 = vcmask 261120
    %v289 = vsel %vm288, %v263, 0.0
    %290 = vadd.xlane.f32.xlu0 %v289
    %v291 = vpop.xlane.xlu0 %290
    %v292 = vsel %vm288, %v266, 0.0
    %293 = vadd.xlane.f32.xlu0 %v292
    %v294 = vpop.xlane.xlu0 %293
    %v295 = vsel %vm288, %v269, 0.0
    %296 = vadd.xlane.f32.xlu0 %v295
    %v297 = vpop.xlane.xlu0 %296
    %v298 = vsel %vm288, %v272, 0.0
    %299 = vadd.xlane.f32.xlu0 %v298
    %v300 = vpop.xlane.xlu0 %299
    %v301 = vsel %vm288, %v275, 0.0
    %302 = vadd.xlane.f32.xlu0 %v301
    %v303 = vpop.xlane.xlu0 %302
    %v304 = vsel %vm288, %v278, 0.0
    %305 = vadd.xlane.f32.xlu0 %v304
    %v306 = vpop.xlane.xlu0 %305
    %v307 = vsel %vm288, %v281, 0.0
    %308 = vadd.xlane.f32.xlu0 %v307
    %v309 = vpop.xlane.xlu0 %308
    %v310 = vsel %vm288, %v284, 0.0
    %311 = vadd.xlane.f32.xlu0 %v310
    %v312 = vpop.xlane.xlu0 %311
    %v313 = vrcp.pop 32.0
    %v314 = vmul.f32 32.0, %v313
    %v315 = vsub.f32 1.0, %v314
    %v316 = vmul.f32 %v313, %v315
    %v317 = vadd.f32 %v313, %v316
    %vm318 = vweird.f32 %v313
    %v319 = vsel %vm318, %v313, %v317
    %v320 = vmul.f32 %v291, %v319
    %v321 = vmul.f32 %v294, %v319
    %v322 = vmul.f32 %v297, %v319
    %v323 = vmul.f32 %v300, %v319
    %v324 = vmul.f32 %v303, %v319
    %v325 = vmul.f32 %v306, %v319
    %v326 = vmul.f32 %v309, %v319
    %v327 = vmul.f32 %v312, %v319
    %v328 = vsub.f32 %v263, %v320
    %v329 = vsub.f32 %v266, %v321
    %v330 = vsub.f32 %v269, %v322
    %v331 = vsub.f32 %v272, %v323
    %v332 = vsub.f32 %v275, %v324
    %v333 = vsub.f32 %v278, %v325
    %v334 = vsub.f32 %v281, %v326
    %v335 = vsub.f32 %v284, %v327
    %v336 = vmul.f32 %v328, %v328
    %v337 = vmul.f32 %v329, %v329
    %v338 = vmul.f32 %v330, %v330
    %v339 = vmul.f32 %v331, %v331
    %v340 = vmul.f32 %v332, %v332
    %v341 = vmul.f32 %v333, %v333
    %v342 = vmul.f32 %v334, %v334
    %v343 = vmul.f32 %v335, %v335
    %v344 = vsel %vm288, %v336, 0.0
    %345 = vadd.xlane.f32.xlu0 %v344
    %v346 = vpop.xlane.xlu0 %345
    %v347 = vsel %vm288, %v337, 0.0
    %348 = vadd.xlane.f32.xlu0 %v347
    %v349 = vpop.xlane.xlu0 %348
    %v350 = vsel %vm288, %v338, 0.0
    %351 = vadd.xlane.f32.xlu0 %v350
    %v352 = vpop.xlane.xlu0 %351
    %v353 = vsel %vm288, %v339, 0.0
    %354 = vadd.xlane.f32.xlu0 %v353
    %v355 = vpop.xlane.xlu0 %354
    %v356 = vsel %vm288, %v340, 0.0
    %357 = vadd.xlane.f32.xlu0 %v356
    %v358 = vpop.xlane.xlu0 %357
    %v359 = vsel %vm288, %v341, 0.0
    %360 = vadd.xlane.f32.xlu0 %v359
    %v361 = vpop.xlane.xlu0 %360
    %v362 = vsel %vm288, %v342, 0.0
    %363 = vadd.xlane.f32.xlu0 %v362
    %v364 = vpop.xlane.xlu0 %363
    %v365 = vsel %vm288, %v343, 0.0
    %366 = vadd.xlane.f32.xlu0 %v365
    %v367 = vpop.xlane.xlu0 %366
    %v368 = vmul.f32 %v346, %v319
    %v369 = vmul.f32 %v349, %v319
    %v370 = vmul.f32 %v352, %v319
    %v371 = vmul.f32 %v355, %v319
    %v372 = vmul.f32 %v358, %v319
    %v373 = vmul.f32 %v361, %v319
    %v374 = vmul.f32 %v364, %v319
    %v375 = vmul.f32 %v367, %v319
    %v376 = vadd.f32 %v368, 1e-05
    %v377 = vadd.f32 %v369, 1e-05
    %v378 = vadd.f32 %v370, 1e-05
    %v379 = vadd.f32 %v371, 1e-05
    %v380 = vadd.f32 %v372, 1e-05
    %v381 = vadd.f32 %v373, 1e-05
    %v382 = vadd.f32 %v374, 1e-05
    %v383 = vadd.f32 %v375, 1e-05
    %v384 = vrsqrt.pop %v376
    %v385 = vmul.f32 %v384, %v376
    %v386 = vmul.f32 %v385, %v384
    %v387 = vmul.f32 0.5, %v386
    %v388 = vsub.f32 1.5, %v387
    %v389 = vmul.f32 %v384, %v388
    %vm390 = vweird.f32 %v376
    %vm391 = vweird.f32 %v384
    %vm392 = vmor %vm390, %vm391
    %v393 = vsel %vm392, %v384, %v389
    %v394 = vrsqrt.pop %v377
    %v395 = vmul.f32 %v394, %v377
    %v396 = vmul.f32 %v395, %v394
    %v397 = vmul.f32 0.5, %v396
    %v398 = vsub.f32 1.5, %v397
    %v399 = vmul.f32 %v394, %v398
    %vm400 = vweird.f32 %v377
    %vm401 = vweird.f32 %v394
    %vm402 = vmor %vm400, %vm401
    %v403 = vsel %vm402, %v394, %v399
    %v404 = vrsqrt.pop %v378
    %v405 = vmul.f32 %v404, %v378
    %v406 = vmul.f32 %v405, %v404
    %v407 = vmul.f32 0.5, %v406
    %v408 = vsub.f32 1.5, %v407
    %v409 = vmul.f32 %v404, %v408
    %vm410 = vweird.f32 %v378
    %vm411 = vweird.f32 %v404
    %vm412 = vmor %vm410, %vm411
    %v413 = vsel %vm412, %v404, %v409
    %v414 = vrsqrt.pop %v379
    %v415 = vmul.f32 %v414, %v379
    %v416 = vmul.f32 %v415, %v414
    %v417 = vmul.f32 0.5, %v416
    %v418 = vsub.f32 1.5, %v417
    %v419 = vmul.f32 %v414, %v418
    %vm420 = vweird.f32 %v379
    %vm421 = vweird.f32 %v414
    %vm422 = vmor %vm420, %vm421
    %v423 = vsel %vm422, %v414, %v419
    %v424 = vrsqrt.pop %v380
    %v425 = vmul.f32 %v424, %v380
    %v426 = vmul.f32 %v425, %v424
    %v427 = vmul.f32 0.5, %v426
    %v428 = vsub.f32 1.5, %v427
    %v429 = vmul.f32 %v424, %v428
    %vm430 = vweird.f32 %v380
    %vm431 = vweird.f32 %v424
    %vm432 = vmor %vm430, %vm431
    %v433 = vsel %vm432, %v424, %v429
    %v434 = vrsqrt.pop %v381
    %v435 = vmul.f32 %v434, %v381
    %v436 = vmul.f32 %v435, %v434
    %v437 = vmul.f32 0.5, %v436
    %v438 = vsub.f32 1.5, %v437
    %v439 = vmul.f32 %v434, %v438
    %vm440 = vweird.f32 %v381
    %vm441 = vweird.f32 %v434
    %vm442 = vmor %vm440, %vm441
    %v443 = vsel %vm442, %v434, %v439
    %v444 = vrsqrt.pop %v382
    %v445 = vmul.f32 %v444, %v382
    %v446 = vmul.f32 %v445, %v444
    %v447 = vmul.f32 0.5, %v446
    %v448 = vsub.f32 1.5, %v447
    %v449 = vmul.f32 %v444, %v448
    %vm450 = vweird.f32 %v382
    %vm451 = vweird.f32 %v444
    %vm452 = vmor %vm450, %vm451
    %v453 = vsel %vm452, %v444, %v449
    %v454 = vrsqrt.pop %v383
    %v455 = vmul.f32 %v454, %v383
    %v456 = vmul.f32 %v455, %v454
    %v457 = vmul.f32 0.5, %v456
    %v458 = vsub.f32 1.5, %v457
    %v459 = vmul.f32 %v454, %v458
    %vm460 = vweird.f32 %v383
    %vm461 = vweird.f32 %v454
    %vm462 = vmor %vm460, %vm461
    %v463 = vsel %vm462, %v454, %v459
    %v464 = vmul.f32 %v328, %v393
    %v465 = vmul.f32 %v329, %v403
    %v466 = vmul.f32 %v330, %v413
    %v467 = vmul.f32 %v331, %v423
    %v468 = vmul.f32 %v332, %v433
    %v469 = vmul.f32 %v333, %v443
    %v470 = vmul.f32 %v334, %v453
    %v471 = vmul.f32 %v335, %v463
    %v473 = vperm.slane %v286, 0
    %v475 = vmul.f32 %v464, %v473
    %v476 = vmul.f32 %v465, %v473
    %v477 = vmul.f32 %v466, %v473
    %v478 = vmul.f32 %v467, %v473
    %v479 = vmul.f32 %v468, %v473
    %v480 = vmul.f32 %v469, %v473
    %v481 = vmul.f32 %v470, %v473
    %v482 = vmul.f32 %v471, %v473
    %v484 = vperm.slane %v287, 0
    %v486 = vadd.f32 %v475, %v484
    %v487 = vadd.f32 %v476, %v484
    %v488 = vadd.f32 %v477, %v484
    %v489 = vadd.f32 %v478, %v484
    %v490 = vadd.f32 %v479, %v484
    %v491 = vadd.f32 %v480, %v484
    %v492 = vadd.f32 %v481, %v484
    %v493 = vadd.f32 %v482, %v484
    %v494 = vtanh.pop %v486
    %v495 = vtanh.pop %v487
    %v496 = vtanh.pop %v488
    %v497 = vtanh.pop %v489
    %v498 = vtanh.pop %v490
    %v499 = vtanh.pop %v491
    %v500 = vtanh.pop %v492
    %v501 = vtanh.pop %v493
    %v502 = vld [vmem:[%s8] sm:$0xff]
    %v503 = vld [vmem:[%s8 + $0x8] sm:$0xff]
    %v504 = vld [vmem:[%s8 + $0x10] sm:$0xff]
    %v505 = vld [vmem:[%s8 + $0x18] sm:$0xff]
    %v506 = vld [vmem:[#allocation10] sm:$0x1]
    %v508 = vperm.slane %v506, 0
    %v511 = vsel %vm288, %v494, 0
    %v514 = vsel %vm288, %v495, 0
    %v517 = vsel %vm288, %v496, 0
    %v520 = vsel %vm288, %v497, 0
    %v523 = vsel %vm288, %v498, 0
    %v526 = vsel %vm288, %v499, 0
    %v529 = vsel %vm288, %v500, 0
    %v532 = vsel %vm288, %v501, 0
    %534 = vmatpush.msra.mxu0 0.0
    %535 = vmatpush.msra.mxu0 0.0
    %536 = vmatpush.msra.mxu0 0.0
    %537 = vmatpush.msra.mxu0 0.0
    %538 = vmatpush.msra.mxu0 0.0
    %539 = vmatpush.msra.mxu0 0.0
    %540 = vmatpush.msra.mxu0 0.0
    %541 = vmatpush.msra.mxu0 0.0
    %542 = vmatpush.msra.mxu0 0.0
    %543 = vmatpush.msra.mxu0 0.0
    %544 = vmatpush.msra.mxu0 0.0
    %545 = vmatpush.msra.mxu0 0.0
    %546 = vmatpush.msra.mxu0 %v505
    %547 = vmatpush.msra.mxu0 %v504
    %548 = vmatpush.msra.mxu0 %v503
    %549 = vmatpush.msra.mxu0 %v502
    %550 = vmatmul.f32.gmra.mxu0 %v511
    %v551 = vpop.f32.mrf.mxu0
    %v552 = vadd.f32 %v508, %v551
    %553 = vmatmul.f32.gmra.mxu0 %v514
    %v554 = vpop.f32.mrf.mxu0
    %v555 = vadd.f32 %v508, %v554
    %556 = vmatmul.f32.gmra.mxu0 %v517
    %v557 = vpop.f32.mrf.mxu0
    %v558 = vadd.f32 %v508, %v557
    %559 = vmatmul.f32.gmra.mxu0 %v520
    %v560 = vpop.f32.mrf.mxu0
    %v561 = vadd.f32 %v508, %v560
    %562 = vmatmul.f32.gmra.mxu0 %v523
    %v563 = vpop.f32.mrf.mxu0
    %v564 = vadd.f32 %v508, %v563
    %565 = vmatmul.f32.gmra.mxu0 %v526
    %v566 = vpop.f32.mrf.mxu0
    %v567 = vadd.f32 %v508, %v566
    %568 = vmatmul.f32.gmra.mxu0 %v529
    %v569 = vpop.f32.mrf.mxu0
    %v570 = vadd.f32 %v508, %v569
    %571 = vmatmul.f32.gmra.mxu0 %v532
    %v572 = vpop.f32.mrf.mxu0
    %v573 = vadd.f32 %v508, %v572
    %574 = vdwg.mxu0
    %575 = vst [vmem:[#allocation2] sm:$0xff] %v552
    %576 = vst [vmem:[#allocation2 + $0x8] sm:$0xff] %v555
    %577 = vst [vmem:[#allocation2 + $0x10] sm:$0xff] %v558
    %578 = vst [vmem:[#allocation2 + $0x18] sm:$0xff] %v561
    %579 = vst [vmem:[#allocation2 + $0x20] sm:$0xff] %v564
    %580 = vst [vmem:[#allocation2 + $0x28] sm:$0xff] %v567
    %581 = vst [vmem:[#allocation2 + $0x30] sm:$0xff] %v570
    %582 = vst [vmem:[#allocation2 + $0x38] sm:$0xff] %v573
    %v583 = vld [vmem:[%s1] sm:$0xff]
    %v584 = vlaneseq
    %v585 = vand.u32 %v584, 127
    %vm586 = vcmp.ge.s32.totalorder %v585, 64
    %vm587 = vcmp.lt.s32.totalorder %v585, 96
    %vm588 = vmand %vm586, %vm587
    %v589 = vld [vmem:[#allocation2] sm:$0xff]
    %v590 = vld [vmem:[%s9] sm:$0xff]
    %v591 = vld [vmem:[%s9 + $0x8] sm:$0xff]
    %v592 = vld [vmem:[%s9 + $0x10] sm:$0xff]
    %v593 = vld [vmem:[%s9 + $0x18] sm:$0xff]
    %v594 = vld [vmem:[%s9 + $0x20] sm:$0xff]
    %v595 = vld [vmem:[%s9 + $0x28] sm:$0xff]
    %v596 = vld [vmem:[%s9 + $0x30] sm:$0xff]
    %v597 = vld [vmem:[%s9 + $0x38] sm:$0xff]
    %v598 = vld [vmem:[%s9 + $0x40] sm:$0xff]
    %v599 = vld [vmem:[%s9 + $0x48] sm:$0xff]
    %v600 = vld [vmem:[%s9 + $0x50] sm:$0xff]
    %v601 = vld [vmem:[%s9 + $0x58] sm:$0xff]
    %v602 = vld [vmem:[%s9 + $0x60] sm:$0xff]
    %v603 = vld [vmem:[%s9 + $0x68] sm:$0xff]
    %v604 = vld [vmem:[%s9 + $0x70] sm:$0xff]
    %v605 = vld [vmem:[%s9 + $0x78] sm:$0xff]
    %606 = vmatpush.msra.mxu0 %v605
    %607 = vmatpush.msra.mxu0 %v604
    %608 = vmatpush.msra.mxu0 %v603
    %609 = vmatpush.msra.mxu0 %v602
    %610 = vmatpush.msra.mxu0 %v601
    %611 = vmatpush.msra.mxu0 %v600
    %612 = vmatpush.msra.mxu0 %v599
    %613 = vmatpush.msra.mxu0 %v598
    %614 = vmatpush.msra.mxu0 %v597
    %615 = vmatpush.msra.mxu0 %v596
    %616 = vmatpush.msra.mxu0 %v595
    %617 = vmatpush.msra.mxu0 %v594
    %618 = vmatpush.msra.mxu0 %v593
    %619 = vmatpush.msra.mxu0 %v592
    %620 = vmatpush.msra.mxu0 %v591
    %621 = vmatpush.msra.mxu0 %v590
    %622 = vmatmul.f32.gmra.mxu0 0.0
    %v623 = vpop.f32.mrf.mxu0
    %v624 = vadd.f32 %v589, %v623
    %625 = vdwg.mxu0
    %v626 = vtanh.pop %v624
    %v627 = vxor.u32 %v624, 2147483648
    %v628 = vmul.f32 %v627, 1.442695
    %v629 = vpow.pop %v628
    %v630 = vadd.f32 %v629, 1.0
    %v631 = vrcp.pop %v630
    %v632 = vmul.f32 %v630, %v631
    %v633 = vsub.f32 1.0, %v632
    %v634 = vmul.f32 %v631, %v633
    %v635 = vadd.f32 %v631, %v634
    %vm636 = vweird.f32 %v630
    %vm637 = vweird.f32 %v631
    %vm638 = vmor %vm636, %vm637
    %v639 = vsel %vm638, %v631, %v635
    %v640 = vand.u32 2147483647, %v630
    %vm641 = vcmp.eq.f32.partialorder %v640, 8.507059e+37
    %v642 = vand.u32 %v630, 2147483648
    %v643 = vor.u32 1.1754944e-38, %v642
    %v644 = vsel %vm641, %v643, %v639
    %v645 = vmul.f32 1.0, %v644
    %v646 = vsel %vm588, %v626, %v645
    %647 = vrot.lane.b32.xlu0 %v646, 96
    %v648 = vpop.permute.xlu0 %647
    %649 = vrot.lane.b32.xlu0 %v646, 64
    %v650 = vpop.permute.xlu0 %649
    %651 = vrot.lane.b32.xlu0 %v646, 32
    %v652 = vpop.permute.xlu0 %651
    %v653 = vmul.f32 %v648, 0.0
    %v654 = vmul.f32 %v646, %v650
    %v655 = vadd.f32 %v653, %v654
    %v656 = vtanh.pop %v655
    %v657 = vmul.f32 %v652, %v656
    %vm658 = vcmp.gt.s32.totalorder %v583, 0
    %v659 = vsel %vm658, 1, 0
    %660 = vset.pattern.permute.xlu0 0
    %661 = vperm.xlu0 %660, %v659
    %v662 = vpop.permute.xlu0 %661
    %vm663 = vcmp.eq.s32.totalorder %v662, 1
    %v664 = vsel %vm663, %v657, 0.0
    %v665 = vsel %vm663, %v655, 0.0
    %s666 = scalar_lea.vmem [#allocation2], 8
    %v667 = vld [vmem:[%s666] sm:$0xff]
    %668 = vmatpush.msra.mxu0 %v605
    %669 = vmatpush.msra.mxu0 %v604
    %670 = vmatpush.msra.mxu0 %v603
    %671 = vmatpush.msra.mxu0 %v602
    %672 = vmatpush.msra.mxu0 %v601
    %673 = vmatpush.msra.mxu0 %v600
    %674 = vmatpush.msra.mxu0 %v599
    %675 = vmatpush.msra.mxu0 %v598
    %676 = vmatpush.msra.mxu0 %v597
    %677 = vmatpush.msra.mxu0 %v596
    %678 = vmatpush.msra.mxu0 %v595
    %679 = vmatpush.msra.mxu0 %v594
    %680 = vmatpush.msra.mxu0 %v593
    %681 = vmatpush.msra.mxu0 %v592
    %682 = vmatpush.msra.mxu0 %v591
    %683 = vmatpush.msra.mxu0 %v590
    %684 = vmatmul.f32.gmra.mxu0 %v664
    %v685 = vpop.f32.mrf.mxu0
    %v686 = vadd.f32 %v667, %v685
    %687 = vdwg.mxu0
    %v688 = vtanh.pop %v686
    %v689 = vxor.u32 %v686, 2147483648
    %v690 = vmul.f32 %v689, 1.442695
    %v691 = vpow.pop %v690
    %v692 = vadd.f32 %v691, 1.0
    %v693 = vrcp.pop %v692
    %v694 = vmul.f32 %v692, %v693
    %v695 = vsub.f32 1.0, %v694
    %v696 = vmul.f32 %v693, %v695
    %v697 = vadd.f32 %v693, %v696
    %vm698 = vweird.f32 %v692
    %vm699 = vweird.f32 %v693
    %vm700 = vmor %vm698, %vm699
    %v701 = vsel %vm700, %v693, %v697
    %v702 = vand.u32 2147483647, %v692
    %vm703 = vcmp.eq.f32.partialorder %v702, 8.507059e+37
    %v704 = vand.u32 %v692, 2147483648
    %v705 = vor.u32 1.1754944e-38, %v704
    %v706 = vsel %vm703, %v705, %v701
    %v707 = vmul.f32 1.0, %v706
    %v708 = vsel %vm588, %v688, %v707
    %709 = vrot.lane.b32.xlu0 %v708, 96
    %v710 = vpop.permute.xlu0 %709
    %711 = vrot.lane.b32.xlu0 %v708, 64
    %v712 = vpop.permute.xlu0 %711
    %713 = vrot.lane.b32.xlu0 %v708, 32
    %v714 = vpop.permute.xlu0 %713
    %v715 = vmul.f32 %v710, %v665
    %v716 = vmul.f32 %v708, %v712
    %v717 = vadd.f32 %v715, %v716
    %v718 = vtanh.pop %v717
    %v719 = vmul.f32 %v714, %v718
    %vm720 = vcmp.gt.s32.totalorder %v583, 1
    %v721 = vsel %vm720, 1, 0
    %722 = vset.pattern.permute.xlu0 0
    %723 = vperm.xlu0 %722, %v721
    %v724 = vpop.permute.xlu0 %723
    %vm725 = vcmp.eq.s32.totalorder %v724, 1
    %v726 = vsel %vm725, %v719, %v664
    %v727 = vsel %vm725, %v717, %v665
    %s728 = scalar_lea.vmem [#allocation2], 16
    %v729 = vld [vmem:[%s728] sm:$0xff]
    %730 = vmatpush.msra.mxu0 %v605
    %731 = vmatpush.msra.mxu0 %v604
    %732 = vmatpush.msra.mxu0 %v603
    %733 = vmatpush.msra.mxu0 %v602
    %734 = vmatpush.msra.mxu0 %v601
    %735 = vmatpush.msra.mxu0 %v600
    %736 = vmatpush.msra.mxu0 %v599
    %737 = vmatpush.msra.mxu0 %v598
    %738 = vmatpush.msra.mxu0 %v597
    %739 = vmatpush.msra.mxu0 %v596
    %740 = vmatpush.msra.mxu0 %v595
    %741 = vmatpush.msra.mxu0 %v594
    %742 = vmatpush.msra.mxu0 %v593
    %743 = vmatpush.msra.mxu0 %v592
    %744 = vmatpush.msra.mxu0 %v591
    %745 = vmatpush.msra.mxu0 %v590
    %746 = vmatmul.f32.gmra.mxu0 %v726
    %v747 = vpop.f32.mrf.mxu0
    %v748 = vadd.f32 %v729, %v747
    %749 = vdwg.mxu0
    %v750 = vtanh.pop %v748
    %v751 = vxor.u32 %v748, 2147483648
    %v752 = vmul.f32 %v751, 1.442695
    %v753 = vpow.pop %v752
    %v754 = vadd.f32 %v753, 1.0
    %v755 = vrcp.pop %v754
    %v756 = vmul.f32 %v754, %v755
    %v757 = vsub.f32 1.0, %v756
    %v758 = vmul.f32 %v755, %v757
    %v759 = vadd.f32 %v755, %v758
    %vm760 = vweird.f32 %v754
    %vm761 = vweird.f32 %v755
    %vm762 = vmor %vm760, %vm761
    %v763 = vsel %vm762, %v755, %v759
    %v764 = vand.u32 2147483647, %v754
    %vm765 = vcmp.eq.f32.partialorder %v764, 8.507059e+37
    %v766 = vand.u32 %v754, 2147483648
    %v767 = vor.u32 1.1754944e-38, %v766
    %v768 = vsel %vm765, %v767, %v763
    %v769 = vmul.f32 1.0, %v768
    %v770 = vsel %vm588, %v750, %v769
    %771 = vrot.lane.b32.xlu0 %v770, 96
    %v772 = vpop.permute.xlu0 %771
    %773 = vrot.lane.b32.xlu0 %v770, 64
    %v774 = vpop.permute.xlu0 %773
    %775 = vrot.lane.b32.xlu0 %v770, 32
    %v776 = vpop.permute.xlu0 %775
    %v777 = vmul.f32 %v772, %v727
    %v778 = vmul.f32 %v770, %v774
    %v779 = vadd.f32 %v777, %v778
    %v780 = vtanh.pop %v779
    %v781 = vmul.f32 %v776, %v780
    %vm782 = vcmp.gt.s32.totalorder %v583, 2
    %v783 = vsel %vm782, 1, 0
    %784 = vset.pattern.permute.xlu0 0
    %785 = vperm.xlu0 %784, %v783
    %v786 = vpop.permute.xlu0 %785
    %vm787 = vcmp.eq.s32.totalorder %v786, 1
    %v788 = vsel %vm787, %v781, %v726
    %v789 = vsel %vm787, %v779, %v727
    %s790 = scalar_lea.vmem [#allocation2], 24
    %v791 = vld [vmem:[%s790] sm:$0xff]
    %792 = vmatpush.msra.mxu0 %v605
    %793 = vmatpush.msra.mxu0 %v604
    %794 = vmatpush.msra.mxu0 %v603
    %795 = vmatpush.msra.mxu0 %v602
    %796 = vmatpush.msra.mxu0 %v601
    %797 = vmatpush.msra.mxu0 %v600
    %798 = vmatpush.msra.mxu0 %v599
    %799 = vmatpush.msra.mxu0 %v598
    %800 = vmatpush.msra.mxu0 %v597
    %801 = vmatpush.msra.mxu0 %v596
    %802 = vmatpush.msra.mxu0 %v595
    %803 = vmatpush.msra.mxu0 %v594
    %804 = vmatpush.msra.mxu0 %v593
    %805 = vmatpush.msra.mxu0 %v592
    %806 = vmatpush.msra.mxu0 %v591
    %807 = vmatpush.msra.mxu0 %v590
    %808 = vmatmul.f32.gmra.mxu0 %v788
    %v809 = vpop.f32.mrf.mxu0
    %v810 = vadd.f32 %v791, %v809
    %811 = vdwg.mxu0
    %v812 = vtanh.pop %v810
    %v813 = vxor.u32 %v810, 2147483648
    %v814 = vmul.f32 %v813, 1.442695
    %v815 = vpow.pop %v814
    %v816 = vadd.f32 %v815, 1.0
    %v817 = vrcp.pop %v816
    %v818 = vmul.f32 %v816, %v817
    %v819 = vsub.f32 1.0, %v818
    %v820 = vmul.f32 %v817, %v819
    %v821 = vadd.f32 %v817, %v820
    %vm822 = vweird.f32 %v816
    %vm823 = vweird.f32 %v817
    %vm824 = vmor %vm822, %vm823
    %v825 = vsel %vm824, %v817, %v821
    %v826 = vand.u32 2147483647, %v816
    %vm827 = vcmp.eq.f32.partialorder %v826, 8.507059e+37
    %v828 = vand.u32 %v816, 2147483648
    %v829 = vor.u32 1.1754944e-38, %v828
    %v830 = vsel %vm827, %v829, %v825
    %v831 = vmul.f32 1.0, %v830
    %v832 = vsel %vm588, %v812, %v831
    %833 = vrot.lane.b32.xlu0 %v832, 96
    %v834 = vpop.permute.xlu0 %833
    %835 = vrot.lane.b32.xlu0 %v832, 64
    %v836 = vpop.permute.xlu0 %835
    %837 = vrot.lane.b32.xlu0 %v832, 32
    %v838 = vpop.permute.xlu0 %837
    %v839 = vmul.f32 %v834, %v789
    %v840 = vmul.f32 %v832, %v836
    %v841 = vadd.f32 %v839, %v840
    %v842 = vtanh.pop %v841
    %v843 = vmul.f32 %v838, %v842
    %vm844 = vcmp.gt.s32.totalorder %v583, 3
    %v845 = vsel %vm844, 1, 0
    %846 = vset.pattern.permute.xlu0 0
    %847 = vperm.xlu0 %846, %v845
    %v848 = vpop.permute.xlu0 %847
    %vm849 = vcmp.eq.s32.totalorder %v848, 1
    %v850 = vsel %vm849, %v843, %v788
    %v851 = vsel %vm849, %v841, %v789
    %s852 = scalar_lea.vmem [#allocation2], 32
    %v853 = vld [vmem:[%s852] sm:$0xff]
    %854 = vmatpush.msra.mxu0 %v605
    %855 = vmatpush.msra.mxu0 %v604
    %856 = vmatpush.msra.mxu0 %v603
    %857 = vmatpush.msra.mxu0 %v602
    %858 = vmatpush.msra.mxu0 %v601
    %859 = vmatpush.msra.mxu0 %v600
    %860 = vmatpush.msra.mxu0 %v599
    %861 = vmatpush.msra.mxu0 %v598
    %862 = vmatpush.msra.mxu0 %v597
    %863 = vmatpush.msra.mxu0 %v596
    %864 = vmatpush.msra.mxu0 %v595
    %865 = vmatpush.msra.mxu0 %v594
    %866 = vmatpush.msra.mxu0 %v593
    %867 = vmatpush.msra.mxu0 %v592
    %868 = vmatpush.msra.mxu0 %v591
    %869 = vmatpush.msra.mxu0 %v590
    %870 = vmatmul.f32.gmra.mxu0 %v850
    %v871 = vpop.f32.mrf.mxu0
    %v872 = vadd.f32 %v853, %v871
    %873 = vdwg.mxu0
    %v874 = vtanh.pop %v872
    %v875 = vxor.u32 %v872, 2147483648
    %v876 = vmul.f32 %v875, 1.442695
    %v877 = vpow.pop %v876
    %v878 = vadd.f32 %v877, 1.0
    %v879 = vrcp.pop %v878
    %v880 = vmul.f32 %v878, %v879
    %v881 = vsub.f32 1.0, %v880
    %v882 = vmul.f32 %v879, %v881
    %v883 = vadd.f32 %v879, %v882
    %vm884 = vweird.f32 %v878
    %vm885 = vweird.f32 %v879
    %vm886 = vmor %vm884, %vm885
    %v887 = vsel %vm886, %v879, %v883
    %v888 = vand.u32 2147483647, %v878
    %vm889 = vcmp.eq.f32.partialorder %v888, 8.507059e+37
    %v890 = vand.u32 %v878, 2147483648
    %v891 = vor.u32 1.1754944e-38, %v890
    %v892 = vsel %vm889, %v891, %v887
    %v893 = vmul.f32 1.0, %v892
    %v894 = vsel %vm588, %v874, %v893
    %895 = vrot.lane.b32.xlu0 %v894, 96
    %v896 = vpop.permute.xlu0 %895
    %897 = vrot.lane.b32.xlu0 %v894, 64
    %v898 = vpop.permute.xlu0 %897
    %899 = vrot.lane.b32.xlu0 %v894, 32
    %v900 = vpop.permute.xlu0 %899
    %v901 = vmul.f32 %v896, %v851
    %v902 = vmul.f32 %v894, %v898
    %v903 = vadd.f32 %v901, %v902
    %v904 = vtanh.pop %v903
    %v905 = vmul.f32 %v900, %v904
    %vm906 = vcmp.gt.s32.totalorder %v583, 4
    %v907 = vsel %vm906, 1, 0
    %908 = vset.pattern.permute.xlu0 0
    %909 = vperm.xlu0 %908, %v907
    %v910 = vpop.permute.xlu0 %909
    %vm911 = vcmp.eq.s32.totalorder %v910, 1
    %v912 = vsel %vm911, %v905, %v850
    %v913 = vsel %vm911, %v903, %v851
    %s914 = scalar_lea.vmem [#allocation2], 40
    %v915 = vld [vmem:[%s914] sm:$0xff]
    %916 = vmatpush.msra.mxu0 %v605
    %917 = vmatpush.msra.mxu0 %v604
    %918 = vmatpush.msra.mxu0 %v603
    %919 = vmatpush.msra.mxu0 %v602
    %920 = vmatpush.msra.mxu0 %v601
    %921 = vmatpush.msra.mxu0 %v600
    %922 = vmatpush.msra.mxu0 %v599
    %923 = vmatpush.msra.mxu0 %v598
    %924 = vmatpush.msra.mxu0 %v597
    %925 = vmatpush.msra.mxu0 %v596
    %926 = vmatpush.msra.mxu0 %v595
    %927 = vmatpush.msra.mxu0 %v594
    %928 = vmatpush.msra.mxu0 %v593
    %929 = vmatpush.msra.mxu0 %v592
    %930 = vmatpush.msra.mxu0 %v591
    %931 = vmatpush.msra.mxu0 %v590
    %932 = vmatmul.f32.gmra.mxu0 %v912
    %v933 = vpop.f32.mrf.mxu0
    %v934 = vadd.f32 %v915, %v933
    %935 = vdwg.mxu0
    %v936 = vtanh.pop %v934
    %v937 = vxor.u32 %v934, 2147483648
    %v938 = vmul.f32 %v937, 1.442695
    %v939 = vpow.pop %v938
    %v940 = vadd.f32 %v939, 1.0
    %v941 = vrcp.pop %v940
    %v942 = vmul.f32 %v940, %v941
    %v943 = vsub.f32 1.0, %v942
    %v944 = vmul.f32 %v941, %v943
    %v945 = vadd.f32 %v941, %v944
    %vm946 = vweird.f32 %v940
    %vm947 = vweird.f32 %v941
    %vm948 = vmor %vm946, %vm947
    %v949 = vsel %vm948, %v941, %v945
    %v950 = vand.u32 2147483647, %v940
    %vm951 = vcmp.eq.f32.partialorder %v950, 8.507059e+37
    %v952 = vand.u32 %v940, 2147483648
    %v953 = vor.u32 1.1754944e-38, %v952
    %v954 = vsel %vm951, %v953, %v949
    %v955 = vmul.f32 1.0, %v954
    %v956 = vsel %vm588, %v936, %v955
    %957 = vrot.lane.b32.xlu0 %v956, 96
    %v958 = vpop.permute.xlu0 %957
    %959 = vrot.lane.b32.xlu0 %v956, 64
    %v960 = vpop.permute.xlu0 %959
    %961 = vrot.lane.b32.xlu0 %v956, 32
    %v962 = vpop.permute.xlu0 %961
    %v963 = vmul.f32 %v958, %v913
    %v964 = vmul.f32 %v956, %v960
    %v965 = vadd.f32 %v963, %v964
    %v966 = vtanh.pop %v965
    %v967 = vmul.f32 %v962, %v966
    %vm968 = vcmp.gt.s32.totalorder %v583, 5
    %v969 = vsel %vm968, 1, 0
    %970 = vset.pattern.permute.xlu0 0
    %971 = vperm.xlu0 %970, %v969
    %v972 = vpop.permute.xlu0 %971
    %vm973 = vcmp.eq.s32.totalorder %v972, 1
    %v974 = vsel %vm973, %v967, %v912
    %v975 = vsel %vm973, %v965, %v913
    %s976 = scalar_lea.vmem [#allocation2], 48
    %v977 = vld [vmem:[%s976] sm:$0xff]
    %978 = vmatpush.msra.mxu0 %v605
    %979 = vmatpush.msra.mxu0 %v604
    %980 = vmatpush.msra.mxu0 %v603
    %981 = vmatpush.msra.mxu0 %v602
    %982 = vmatpush.msra.mxu0 %v601
    %983 = vmatpush.msra.mxu0 %v600
    %984 = vmatpush.msra.mxu0 %v599
    %985 = vmatpush.msra.mxu0 %v598
    %986 = vmatpush.msra.mxu0 %v597
    %987 = vmatpush.msra.mxu0 %v596
    %988 = vmatpush.msra.mxu0 %v595
    %989 = vmatpush.msra.mxu0 %v594
    %990 = vmatpush.msra.mxu0 %v593
    %991 = vmatpush.msra.mxu0 %v592
    %992 = vmatpush.msra.mxu0 %v591
    %993 = vmatpush.msra.mxu0 %v590
    %994 = vmatmul.f32.gmra.mxu0 %v974
    %v995 = vpop.f32.mrf.mxu0
    %v996 = vadd.f32 %v977, %v995
    %997 = vdwg.mxu0
    %v998 = vtanh.pop %v996
    %v999 = vxor.u32 %v996, 2147483648
    %v1000 = vmul.f32 %v999, 1.442695
    %v1001 = vpow.pop %v1000
    %v1002 = vadd.f32 %v1001, 1.0
    %v1003 = vrcp.pop %v1002
    %v1004 = vmul.f32 %v1002, %v1003
    %v1005 = vsub.f32 1.0, %v1004
    %v1006 = vmul.f32 %v1003, %v1005
    %v1007 = vadd.f32 %v1003, %v1006
    %vm1008 = vweird.f32 %v1002
    %vm1009 = vweird.f32 %v1003
    %vm1010 = vmor %vm1008, %vm1009
    %v1011 = vsel %vm1010, %v1003, %v1007
    %v1012 = vand.u32 2147483647, %v1002
    %vm1013 = vcmp.eq.f32.partialorder %v1012, 8.507059e+37
    %v1014 = vand.u32 %v1002, 2147483648
    %v1015 = vor.u32 1.1754944e-38, %v1014
    %v1016 = vsel %vm1013, %v1015, %v1011
    %v1017 = vmul.f32 1.0, %v1016
    %v1018 = vsel %vm588, %v998, %v1017
    %1019 = vrot.lane.b32.xlu0 %v1018, 96
    %v1020 = vpop.permute.xlu0 %1019
    %1021 = vrot.lane.b32.xlu0 %v1018, 64
    %v1022 = vpop.permute.xlu0 %1021
    %1023 = vrot.lane.b32.xlu0 %v1018, 32
    %v1024 = vpop.permute.xlu0 %1023
    %v1025 = vmul.f32 %v1020, %v975
    %v1026 = vmul.f32 %v1018, %v1022
    %v1027 = vadd.f32 %v1025, %v1026
    %v1028 = vtanh.pop %v1027
    %v1029 = vmul.f32 %v1024, %v1028
    %vm1030 = vcmp.gt.s32.totalorder %v583, 6
    %v1031 = vsel %vm1030, 1, 0
    %1032 = vset.pattern.permute.xlu0 0
    %1033 = vperm.xlu0 %1032, %v1031
    %v1034 = vpop.permute.xlu0 %1033
    %vm1035 = vcmp.eq.s32.totalorder %v1034, 1
    %v1036 = vsel %vm1035, %v1029, %v974
    %v1037 = vsel %vm1035, %v1027, %v975
    %s1038 = scalar_lea.vmem [#allocation2], 56
    %v1039 = vld [vmem:[%s1038] sm:$0xff]
    %1040 = vmatpush.msra.mxu0 %v605
    %1041 = vmatpush.msra.mxu0 %v604
    %1042 = vmatpush.msra.mxu0 %v603
    %1043 = vmatpush.msra.mxu0 %v602
    %1044 = vmatpush.msra.mxu0 %v601
    %1045 = vmatpush.msra.mxu0 %v600
    %1046 = vmatpush.msra.mxu0 %v599
    %1047 = vmatpush.msra.mxu0 %v598
    %1048 = vmatpush.msra.mxu0 %v597
    %1049 = vmatpush.msra.mxu0 %v596
    %1050 = vmatpush.msra.mxu0 %v595
    %1051 = vmatpush.msra.mxu0 %v594
    %1052 = vmatpush.msra.mxu0 %v593
    %1053 = vmatpush.msra.mxu0 %v592
    %1054 = vmatpush.msra.mxu0 %v591
    %1055 = vmatpush.msra.mxu0 %v590
    %1056 = vmatmul.f32.gmra.mxu0 %v1036
    %v1057 = vpop.f32.mrf.mxu0
    %v1058 = vadd.f32 %v1039, %v1057
    %1059 = vdwg.mxu0
    %v1060 = vtanh.pop %v1058
    %v1061 = vxor.u32 %v1058, 2147483648
    %v1062 = vmul.f32 %v1061, 1.442695
    %v1063 = vpow.pop %v1062
    %v1064 = vadd.f32 %v1063, 1.0
    %v1065 = vrcp.pop %v1064
    %v1066 = vmul.f32 %v1064, %v1065
    %v1067 = vsub.f32 1.0, %v1066
    %v1068 = vmul.f32 %v1065, %v1067
    %v1069 = vadd.f32 %v1065, %v1068
    %vm1070 = vweird.f32 %v1064
    %vm1071 = vweird.f32 %v1065
    %vm1072 = vmor %vm1070, %vm1071
    %v1073 = vsel %vm1072, %v1065, %v1069
    %v1074 = vand.u32 2147483647, %v1064
    %vm1075 = vcmp.eq.f32.partialorder %v1074, 8.507059e+37
    %v1076 = vand.u32 %v1064, 2147483648
    %v1077 = vor.u32 1.1754944e-38, %v1076
    %v1078 = vsel %vm1075, %v1077, %v1073
    %v1079 = vmul.f32 1.0, %v1078
    %v1080 = vsel %vm588, %v1060, %v1079
    %1081 = vrot.lane.b32.xlu0 %v1080, 96
    %v1082 = vpop.permute.xlu0 %1081
    %1083 = vrot.lane.b32.xlu0 %v1080, 64
    %v1084 = vpop.permute.xlu0 %1083
    %1085 = vrot.lane.b32.xlu0 %v1080, 32
    %v1086 = vpop.permute.xlu0 %1085
    %v1087 = vmul.f32 %v1082, %v1037
    %v1088 = vmul.f32 %v1080, %v1084
    %v1089 = vadd.f32 %v1087, %v1088
    %v1090 = vtanh.pop %v1089
    %v1091 = vmul.f32 %v1086, %v1090
    %vm1092 = vcmp.gt.s32.totalorder %v583, 7
    %v1093 = vsel %vm1092, 1, 0
    %1094 = vset.pattern.permute.xlu0 0
    %1095 = vperm.xlu0 %1094, %v1093
    %v1096 = vpop.permute.xlu0 %1095
    %vm1097 = vcmp.eq.s32.totalorder %v1096, 1
    %v1098 = vsel %vm1097, %v1091, %v1036
    %v1099 = vld [vmem:[#allocation11] sm:$0x1]
    %v1100 = vld [vmem:[#allocation13] sm:$0x1]
    %v1101 = vsel %vm288, %v1098, 0.0
    %1102 = vadd.xlane.f32.xlu0 %v1101
    %v1103 = vpop.xlane.xlu0 %1102
    %v1104 = vmul.f32 %v1103, %v319
    %v1105 = vsub.f32 %v1098, %v1104
    %v1106 = vmul.f32 %v1105, %v1105
    %v1107 = vsel %vm288, %v1106, 0.0
    %1108 = vadd.xlane.f32.xlu0 %v1107
    %v1109 = vpop.xlane.xlu0 %1108
    %v1110 = vmul.f32 %v1109, %v319
    %v1111 = vadd.f32 %v1110, 1e-05
    %v1112 = vrsqrt.pop %v1111
    %v1113 = vmul.f32 %v1112, %v1111
    %v1114 = vmul.f32 %v1113, %v1112
    %v1115 = vmul.f32 0.5, %v1114
    %v1116 = vsub.f32 1.5, %v1115
    %v1117 = vmul.f32 %v1112, %v1116
    %vm1118 = vweird.f32 %v1111
    %vm1119 = vweird.f32 %v1112
    %vm1120 = vmor %vm1118, %vm1119
    %v1121 = vsel %vm1120, %v1112, %v1117
    %v1122 = vmul.f32 %v1105, %v1121
    %v1124 = vperm.slane %v1099, 0
    %v1126 = vmul.f32 %v1122, %v1124
    %v1128 = vperm.slane %v1100, 0
    %v1130 = vadd.f32 %v1126, %v1128
    %v1131 = vld [vmem:[%s13] sm:$0xff]
    %v1132 = vld [vmem:[%s13 + $0x8] sm:$0xff]
    %v1133 = vld [vmem:[%s13 + $0x10] sm:$0xff]
    %v1134 = vld [vmem:[%s13 + $0x18] sm:$0xff]
    %v1135 = vld [vmem:[#allocation14] sm:$0x1]
    %v1137 = vperm.slane %v1135, 0
    %v1140 = vsel %vm288, %v1130, 0
    %1142 = vmatpush.msra.mxu0 0.0
    %1143 = vmatpush.msra.mxu0 0.0
    %1144 = vmatpush.msra.mxu0 0.0
    %1145 = vmatpush.msra.mxu0 0.0
    %1146 = vmatpush.msra.mxu0 0.0
    %1147 = vmatpush.msra.mxu0 0.0
    %1148 = vmatpush.msra.mxu0 0.0
    %1149 = vmatpush.msra.mxu0 0.0
    %1150 = vmatpush.msra.mxu0 0.0
    %1151 = vmatpush.msra.mxu0 0.0
    %1152 = vmatpush.msra.mxu0 0.0
    %1153 = vmatpush.msra.mxu0 0.0
    %1154 = vmatpush.msra.mxu0 %v1134
    %1155 = vmatpush.msra.mxu0 %v1133
    %1156 = vmatpush.msra.mxu0 %v1132
    %1157 = vmatpush.msra.mxu0 %v1131
    %1158 = vmatmul.f32.gmra.mxu0 %v1140
    %v1159 = vpop.f32.mrf.mxu0
    %v1160 = vadd.f32 %v1137, %v1159
    %1161 = vdwg.mxu0
    %v1162 = vtanh.pop %v1160
    %1163 = vst [vmem:[#allocation20] sm:$0xff] %v1162
    %v1164 = vld [vmem:[%s3] sm:$0xff]
    %v1165 = vld [vmem:[#allocation16] sm:$0xff]
    %v1166 = vld [vmem:[#allocation17] sm:$0x1]
    %v1168 = vperm.slane %v1166, 0
    %vm1170 = vcmask 64512
    %v1172 = vsel %vm1170, %v1164, 0
    %1174 = vmatpush.msra.mxu0 0.0
    %1175 = vmatpush.msra.mxu0 0.0
    %1176 = vmatpush.msra.mxu0 0.0
    %1177 = vmatpush.msra.mxu0 0.0
    %1178 = vmatpush.msra.mxu0 0.0
    %1179 = vmatpush.msra.mxu0 0.0
    %1180 = vmatpush.msra.mxu0 0.0
    %1181 = vmatpush.msra.mxu0 0.0
    %1182 = vmatpush.msra.mxu0 0.0
    %1183 = vmatpush.msra.mxu0 0.0
    %1184 = vmatpush.msra.mxu0 0.0
    %1185 = vmatpush.msra.mxu0 0.0
    %1186 = vmatpush.msra.mxu0 0.0
    %1187 = vmatpush.msra.mxu0 0.0
    %1188 = vmatpush.msra.mxu0 0.0
    %1189 = vmatpush.msra.mxu0 %v1165
    %1190 = vmatmul.f32.gmra.mxu0 %v1172
    %v1191 = vpop.f32.mrf.mxu0
    %v1192 = vadd.f32 %v1168, %v1191
    %1193 = vdwg.mxu0
    %v1194 = vld [vmem:[#allocation19] sm:$0x1]
    %v1195 = vld [vmem:[%s18] sm:$0x1]
    %v1196 = vsel %vm220, %v1192, 0.0
    %1197 = vadd.xlane.f32.xlu0 %v1196
    %v1198 = vpop.xlane.xlu0 %1197
    %v1199 = vrcp.pop 16.0
    %v1200 = vmul.f32 16.0, %v1199
    %v1201 = vsub.f32 1.0, %v1200
    %v1202 = vmul.f32 %v1199, %v1201
    %v1203 = vadd.f32 %v1199, %v1202
    %vm1204 = vweird.f32 %v1199
    %v1205 = vsel %vm1204, %v1199, %v1203
    %v1206 = vmul.f32 %v1198, %v1205
    %v1207 = vsub.f32 %v1192, %v1206
    %v1208 = vmul.f32 %v1207, %v1207
    %v1209 = vsel %vm220, %v1208, 0.0
    %1210 = vadd.xlane.f32.xlu0 %v1209
    %v1211 = vpop.xlane.xlu0 %1210
    %v1212 = vmul.f32 %v1211, %v1205
    %v1213 = vadd.f32 %v1212, 1e-05
    %v1214 = vrsqrt.pop %v1213
    %v1215 = vmul.f32 %v1214, %v1213
    %v1216 = vmul.f32 %v1215, %v1214
    %v1217 = vmul.f32 0.5, %v1216
    %v1218 = vsub.f32 1.5, %v1217
    %v1219 = vmul.f32 %v1214, %v1218
    %vm1220 = vweird.f32 %v1213
    %vm1221 = vweird.f32 %v1214
    %vm1222 = vmor %vm1220, %vm1221
    %v1223 = vsel %vm1222, %v1214, %v1219
    %v1224 = vmul.f32 %v1207, %v1223
    %v1226 = vperm.slane %v1194, 0
    %v1228 = vmul.f32 %v1224, %v1226
    %v1230 = vperm.slane %v1195, 0
    %v1232 = vadd.f32 %v1228, %v1230
    %v1233 = vtanh.pop %v1232
    %v1234 = vld [vmem:[%s19] sm:$0xff]
    %v1235 = vld [vmem:[%s19 + $0x8] sm:$0xff]
    %v1236 = vld [vmem:[%s20] sm:$0x1]
    %v1238 = vperm.slane %v1236, 0
    %v1241 = vsel %vm220, %v1233, 0
    %1243 = vmatpush.msra.mxu0 0.0
    %1244 = vmatpush.msra.mxu0 0.0
    %1245 = vmatpush.msra.mxu0 0.0
    %1246 = vmatpush.msra.mxu0 0.0
    %1247 = vmatpush.msra.mxu0 0.0
    %1248 = vmatpush.msra.mxu0 0.0
    %1249 = vmatpush.msra.mxu0 0.0
    %1250 = vmatpush.msra.mxu0 0.0
    %1251 = vmatpush.msra.mxu0 0.0
    %1252 = vmatpush.msra.mxu0 0.0
    %1253 = vmatpush.msra.mxu0 0.0
    %1254 = vmatpush.msra.mxu0 0.0
    %1255 = vmatpush.msra.mxu0 0.0
    %1256 = vmatpush.msra.mxu0 0.0
    %1257 = vmatpush.msra.mxu0 %v1235
    %1258 = vmatpush.msra.mxu0 %v1234
    %1259 = vmatmul.f32.gmra.mxu0 %v1241
    %v1260 = vpop.f32.mrf.mxu0
    %v1261 = vadd.f32 %v1238, %v1260
    %1262 = vdwg.mxu0
    %v1263 = vxor.u32 %v1261, 2147483648
    %v1264 = vmul.f32 %v1263, 1.442695
    %v1265 = vpow.pop %v1264
    %v1266 = vadd.f32 %v1265, 1.0
    %v1267 = vrcp.pop %v1266
    %v1268 = vmul.f32 %v1266, %v1267
    %v1269 = vsub.f32 1.0, %v1268
    %v1270 = vmul.f32 %v1267, %v1269
    %v1271 = vadd.f32 %v1267, %v1270
    %vm1272 = vweird.f32 %v1266
    %vm1273 = vweird.f32 %v1267
    %vm1274 = vmor %vm1272, %vm1273
    %v1275 = vsel %vm1274, %v1267, %v1271
    %v1276 = vand.u32 2147483647, %v1266
    %vm1277 = vcmp.eq.f32.partialorder %v1276, 8.507059e+37
    %v1278 = vand.u32 %v1266, 2147483648
    %v1279 = vor.u32 1.1754944e-38, %v1278
    %v1280 = vsel %vm1277, %v1279, %v1275
    %v1281 = vmul.f32 1.0, %v1280
    %1282 = vst [vmem:[#allocation21] sm:$0xff] %v1281
    %v1283 = vld [vmem:[%s2] sm:$0x1]
    %v1284 = vlaneseq
    %v1285 = vshrl.u32 %v1284, 7
    %v1286 = vperm.slane %v1283, 0
    %vm1287 = vcmp.eq.s32.totalorder %v1285, %v1286
    %v1288 = vsel %vm1287, 1, 0
    %v1289 = vcvt.s32.f32 %v1288
    %vm1290 = vcmp.eq.s32.totalorder %v585, 0
    %vm1291 = vcmp.eq.s32.totalorder %v585, 1
    %v1292 = vsel %vm1291, 1.0, 0.0
    %v1293 = vsel %vm1290, %v1281, %v1292
    %v1295 = vsel %vm1170, %v1289, 0
    %1297 = vmatpush.msra.mxu0 0.0
    %1298 = vmatpush.msra.mxu0 0.0
    %1299 = vmatpush.msra.mxu0 0.0
    %1300 = vmatpush.msra.mxu0 0.0
    %1301 = vmatpush.msra.mxu0 0.0
    %1302 = vmatpush.msra.mxu0 0.0
    %1303 = vmatpush.msra.mxu0 0.0
    %1304 = vmatpush.msra.mxu0 0.0
    %1305 = vmatpush.msra.mxu0 0.0
    %1306 = vmatpush.msra.mxu0 0.0
    %1307 = vmatpush.msra.mxu0 0.0
    %1308 = vmatpush.msra.mxu0 0.0
    %1309 = vmatpush.msra.mxu0 0.0
    %1310 = vmatpush.msra.mxu0 0.0
    %1311 = vmatpush.msra.mxu0 0.0
    %1312 = vmatpush.msra.mxu0 %v1293
    %1313 = vmatmul.f32.gmra.mxu0 %v1295
    %v1314 = vpop.f32.mrf.mxu0
    %v1315 = vadd.f32 0.0, %v1314
    %1316 = vdwg.mxu0
    %v1317 = vmax.f32 %v1315, 1.0
    %1319 = vrot.lane.b32.xlu0 %v1317, 127
    %v1320 = vpop.permute.xlu0 %1319
    %v1322 = vrcp.pop %v1320
    %v1323 = vmul.f32 %v1320, %v1322
    %v1324 = vsub.f32 1.0, %v1323
    %v1325 = vmul.f32 %v1322, %v1324
    %v1326 = vadd.f32 %v1322, %v1325
    %vm1327 = vweird.f32 %v1320
    %vm1328 = vweird.f32 %v1322
    %vm1329 = vmor %vm1327, %vm1328
    %v1330 = vsel %vm1329, %v1322, %v1326
    %v1331 = vand.u32 2147483647, %v1320
    %vm1332 = vcmp.eq.f32.partialorder %v1331, 8.507059e+37
    %v1333 = vand.u32 %v1320, 2147483648
    %v1334 = vor.u32 1.1754944e-38, %v1333
    %v1335 = vsel %vm1332, %v1334, %v1330
    %v1336 = vmul.f32 %v1315, %v1335
    %s1337 = sld [smem:[#allocation3]]
    %s1338 = sld [smem:[#allocation4]]
    %v1339 = vld [vmem:[%s21] sm:$0xff]
    %v1340 = vld [vmem:[%s21 + $0x8] sm:$0xff]
    %v1341 = vld [vmem:[%s21 + $0x10] sm:$0xff]
    %v1342 = vld [vmem:[%s21 + $0x18] sm:$0xff]
    %v1343 = vld [vmem:[%s21 + $0x20] sm:$0xff]
    %v1344 = vld [vmem:[%s21 + $0x28] sm:$0xff]
    %v1345 = vld [vmem:[%s21 + $0x30] sm:$0xff]
    %v1346 = vld [vmem:[%s21 + $0x38] sm:$0xff]
    %v1347 = vld [vmem:[%s21 + $0x40] sm:$0xff]
    %v1348 = vld [vmem:[%s21 + $0x48] sm:$0xff]
    %v1349 = vld [vmem:[%s21 + $0x50] sm:$0xff]
    %v1350 = vld [vmem:[%s21 + $0x58] sm:$0xff]
    %v1351 = vld [vmem:[%s21 + $0x60] sm:$0xff]
    %v1352 = vld [vmem:[%s21 + $0x68] sm:$0xff]
    %v1353 = vld [vmem:[%s21 + $0x70] sm:$0xff]
    %v1354 = vld [vmem:[%s21 + $0x78] sm:$0xff]
    %v1355 = vstv %s1337
    %v1356 = vmul.f32 %v1336, %v1355
    %1357 = vmatpush.msra.mxu0 %v1354
    %1358 = vmatpush.msra.mxu0 %v1353
    %1359 = vmatpush.msra.mxu0 %v1352
    %1360 = vmatpush.msra.mxu0 %v1351
    %1361 = vmatpush.msra.mxu0 %v1350
    %1362 = vmatpush.msra.mxu0 %v1349
    %1363 = vmatpush.msra.mxu0 %v1348
    %1364 = vmatpush.msra.mxu0 %v1347
    %1365 = vmatpush.msra.mxu0 %v1346
    %1366 = vmatpush.msra.mxu0 %v1345
    %1367 = vmatpush.msra.mxu0 %v1344
    %1368 = vmatpush.msra.mxu0 %v1343
    %1369 = vmatpush.msra.mxu0 %v1342
    %1370 = vmatpush.msra.mxu0 %v1341
    %1371 = vmatpush.msra.mxu0 %v1340
    %1372 = vmatpush.msra.mxu0 %v1339
    %1373 = vmatmul.f32.gmra.mxu0 %v1162
    %v1374 = vpop.f32.mrf.mxu0
    %v1375 = vadd.f32 %v1356, %v1374
    %1376 = vdwg.mxu0
    %v1377 = vstv %s1338
    %v1378 = vadd.f32 %v1375, %v1377
    %v1379 = vxor.u32 %v1378, 2147483648
    %v1380 = vmul.f32 %v1379, 1.442695
    %v1381 = vpow.pop %v1380
    %v1382 = vadd.f32 %v1381, 1.0
    %v1383 = vrcp.pop %v1382
    %v1384 = vmul.f32 %v1382, %v1383
    %v1385 = vsub.f32 1.0, %v1384
    %v1386 = vmul.f32 %v1383, %v1385
    %v1387 = vadd.f32 %v1383, %v1386
    %vm1388 = vweird.f32 %v1382
    %vm1389 = vweird.f32 %v1383
    %vm1390 = vmor %vm1388, %vm1389
    %v1391 = vsel %vm1390, %v1383, %v1387
    %v1392 = vand.u32 2147483647, %v1382
    %vm1393 = vcmp.eq.f32.partialorder %v1392, 8.507059e+37
    %v1394 = vand.u32 %v1382, 2147483648
    %v1395 = vor.u32 1.1754944e-38, %v1394
    %v1396 = vsel %vm1393, %v1395, %v1391
    %v1397 = vmul.f32 1.0, %v1396
    %1399 = vset.pattern.permute.xlu0 0
    %1400 = vperm.xlu0 %1399, %v1397
    %v1401 = vpop.permute.xlu0 %1400
    %1403 = vst [vmem:[#allocation23] sm:$0xff] %v1401
    // Predicated region
    $region134: #{tpu_custom_call.1} parent=1 // pred_check
      _
    $region135: #{tpu_custom_call.1} parent=1 // pred_check_branch
      %1405 = sbr.rel (0) target = $region137
    $region136: #{tpu_custom_call.1} parent=1 // pred_region
      %1407 = vsyncadd [#allocation7], 0
      %s1409 = sshll.u32 [#allocation20], 4
      %s1410 = int_to_ptr.vmem [resolvable:$true] %s1409
      %s1411 = sshll.u32 %s24, 4
      %s1412 = int_to_ptr.hbm [resolvable:$true] %s1411
      %1414 = dma.vmem_to_hbm [thread:$0]  %s1410, 128, %s1412, [#allocation7]
    $region137: #{tpu_custom_call.1} parent=1 // pred_fallthru
      _
    // Predicated region
    $region138: #{tpu_custom_call.1} parent=1 // pred_check
      _
    $region139: #{tpu_custom_call.1} parent=1 // pred_check_branch
      %1416 = sbr.rel (0) target = $region141
    $region140: #{tpu_custom_call.1} parent=1 // pred_region
      %1418 = vsyncadd [#allocation22], 0
      %s1420 = sshll.u32 [#allocation21], 4
      %s1421 = int_to_ptr.vmem [resolvable:$true] %s1420
      %s1422 = sshll.u32 %s25, 4
      %s1423 = int_to_ptr.hbm [resolvable:$true] %s1422
      %1425 = dma.vmem_to_hbm [thread:$0]  %s1421, 128, %s1423, [#allocation22]
    $region141: #{tpu_custom_call.1} parent=1 // pred_fallthru
      _
    // Predicated region
    $region142: #{tpu_custom_call.1} parent=1 // pred_check
      _
    $region143: #{tpu_custom_call.1} parent=1 // pred_check_branch
      %1427 = sbr.rel (0) target = $region145
    $region144: #{tpu_custom_call.1} parent=1 // pred_region
      %1429 = vsyncadd [#allocation22], 0
      %s1431 = sshll.u32 [#allocation23], 4
      %s1432 = int_to_ptr.vmem [resolvable:$true] %s1431
      %s1433 = sshll.u32 %s26, 4
      %s1434 = int_to_ptr.hbm [resolvable:$true] %s1433
      %1436 = dma.vmem_to_hbm [thread:$0]  %s1432, 128, %s1434, [#allocation22]
    $region145: #{tpu_custom_call.1} parent=1 // pred_fallthru
      _
    // Predicated region
    $region146: #{tpu_custom_call.1} parent=1 // pred_check
      _
    $region147: #{tpu_custom_call.1} parent=1 // pred_check_branch
      %1438 = sbr.rel (0) target = $region149
    $region148: #{tpu_custom_call.1} parent=1 // pred_region
      %1440 = dma.done [#allocation7], 128
    $region149: #{tpu_custom_call.1} parent=1 // pred_fallthru
      _
    // Predicated region
    $region150: #{tpu_custom_call.1} parent=1 // pred_check
      _
    $region151: #{tpu_custom_call.1} parent=1 // pred_check_branch
      %1442 = sbr.rel (0) target = $region153
    $region152: #{tpu_custom_call.1} parent=1 // pred_region
      %1444 = dma.done [#allocation22], 128
    $region153: #{tpu_custom_call.1} parent=1 // pred_fallthru
      _
    // Predicated region
    $region154: #{tpu_custom_call.1} parent=1 // pred_check
      _
    $region155: #{tpu_custom_call.1} parent=1 // pred_check_branch
      %1446 = sbr.rel (0) target = $region157
    $region156: #{tpu_custom_call.1} parent=1 // pred_region
      %1448 = dma.done [#allocation22], 128
    $region157: #{tpu_custom_call.1} parent=1 // pred_fallthru
      _
    %1449 = vsyncpa [#allocation6], 1
    %1450 = vsyncpa [#allocation9], 1
    %1451 = vsyncpa [#allocation12], 1
    %1452 = vsyncpa [#allocation15], 1
    %1453 = vsyncpa [#allocation18], 1
    %1454 = vsyncpa [#allocation7], 1
    %1455 = vsyncpa [#allocation22], 1

</llo_original>
